<compile_context>
chip_gen: v5e
topology: v5e:2x2
jax: 0.10.0
libtpu: 0.0.40
codegen_flags: <defaults>
</compile_context>

<pallas_src>
import functools

import jax
import jax.numpy as jnp
import numpy as np
from jax.experimental import pallas as pl
from jax.experimental.pallas import tpu as pltpu


def _hcl_kernel(labels_ref, cat_labels_ref, logits_ref, out_ref,
                m_sc, l_sc, ll_sc, topv_sc, topi_sc,
                *, B, V, TB, TV, C, K, total_cmds, cat_starts,
                w_cmd, w_cat, upcast_compare):
    bi = pl.program_id(0)
    kv = pl.program_id(1)
    nkv = pl.num_programs(1)
    NEG = jnp.float32(-1e30)
    BIG = jnp.int32(2 ** 30)

    # ---- load tile, mask padded vocab lanes (keep storage dtype on the wire) ----
    x_raw = logits_ref[...]                                          # (TB, TV) storage dtype
    neg_store = jnp.asarray(-1e30, dtype=x_raw.dtype)
    lid = jax.lax.broadcasted_iota(jnp.int32, (TB, TV), 1)           # local lane ids
    valid = lid < (V - kv * TV)
    x_m = jnp.where(valid, x_raw, neg_store)                         # storage dtype, masked
    xf = x_m.astype(jnp.float32)                                     # f32 path (no-op if f32)

    # compare/select path: storage dtype (bf16 ok on v6e/v7x); f32 if upcast_compare (v5e+bf16)
    x_cmp = xf if upcast_compare else x_m
    neg_cmp = jnp.asarray(-1e30, dtype=x_cmp.dtype)

    @pl.when(kv == 0)
    def _init():
        m_sc[...] = jnp.full((TB, 1), NEG, jnp.float32)
        l_sc[...] = jnp.zeros((TB, 1), jnp.float32)
        ll_sc[...] = jnp.zeros((TB, 1), jnp.float32)
        topv_sc[...] = jnp.full((TB, K), NEG, jnp.float32)
        topi_sc[...] = jnp.full((TB, K), BIG, jnp.int32)

    # ---- shared per-row tile max (used by both logsumexp and the first top-K pick) ----
    tile_max = jnp.max(x_cmp, axis=-1, keepdims=True)                # (TB, 1) compare dtype
    tile_max_f = tile_max.astype(jnp.float32)

    # ---- online logsumexp over the vocab axis (command-CE denominator) ----
    m_prev = m_sc[...]
    m_new = jnp.maximum(m_prev, tile_max_f)
    l_sc[...] = jnp.exp(m_prev - m_new) * l_sc[...] + jnp.sum(
        jnp.exp(xf - m_new), axis=-1, keepdims=True)
    m_sc[...] = m_new

    # ---- fused label-logit gather (command-CE numerator), same streaming pass ----
    labels = labels_ref[...]                                         # (TB, 1) int32
    hit = lid == (labels - kv * TV)
    zero_cmp = jnp.asarray(0.0, dtype=x_cmp.dtype)
    ll_sc[...] = ll_sc[...] + jnp.sum(
        jnp.where(hit, x_cmp, zero_cmp), axis=-1, keepdims=True).astype(jnp.float32)

    # ---- tile-local top-K via carried (value, index) threshold; no knockout tile ----
    sel0 = x_cmp == tile_max
    idx0 = jnp.min(jnp.where(sel0, lid, BIG), axis=-1, keepdims=True)
    tv_cols = [tile_max_f]
    ti_cols = [idx0]
    v_prev, i_prev = tile_max, idx0
    for _ in range(1, K):
        elig = jnp.logical_or(
            x_cmp < v_prev,
            jnp.logical_and(x_cmp == v_prev, lid > i_prev))
        ev = jnp.where(elig, x_cmp, neg_cmp)
        mval = jnp.max(ev, axis=-1, keepdims=True)
        midx = jnp.min(jnp.where(ev == mval, lid, BIG), axis=-1, keepdims=True)
        tv_cols.append(mval.astype(jnp.float32))
        ti_cols.append(midx)
        v_prev, i_prev = mval, midx

    tile_v = jnp.concatenate(tv_cols, axis=1)                        # (TB, K) f32
    tile_i = jnp.concatenate(ti_cols, axis=1) + kv * TV              # (TB, K) global ids

    # ---- merge running top-K with the tile candidates (read once, one store each) ----
    cand_v = jnp.concatenate([topv_sc[...], tile_v], axis=1)         # (TB, 2K) f32
    cand_i = jnp.concatenate([topi_sc[...], tile_i], axis=1)         # (TB, 2K) int32
    new_v, new_i = [], []
    v_prev = i_prev = None
    for j in range(K):
        if j == 0:
            ev = cand_v
        else:
            elig = jnp.logical_or(
                cand_v < v_prev,
                jnp.logical_and(cand_v == v_prev, cand_i > i_prev))
            ev = jnp.where(elig, cand_v, NEG)
        mv = jnp.max(ev, axis=-1, keepdims=True)
        mi = jnp.min(jnp.where(ev == mv, cand_i, BIG), axis=-1, keepdims=True)
        new_v.append(mv)
        new_i.append(mi)
        v_prev, i_prev = mv, mi
    topv_sc[...] = jnp.concatenate(new_v, axis=1)                    # single (TB, K) store
    topi_sc[...] = jnp.concatenate(new_i, axis=1)                    # single (TB, K) store

    # ---- finalize: per-row losses, mask padded batch rows, per-tile partial sum ----
    @pl.when(kv == nkv - 1)
    def _finalize():
        row_ids = jax.lax.broadcasted_iota(jnp.int32, (TB, 1), 0) + bi * TB
        row_valid = row_ids < B

        # command cross entropy per row: logsumexp - logit[label]
        cmd_ce = (jnp.log(l_sc[...]) + m_sc[...]) - ll_sc[...]       # (TB, 1)

        # category logits: zeros + scatter-add of the global top-K values;
        # category is computed arithmetically from the winning index.
        cat_ids = jax.lax.broadcasted_iota(jnp.int32, (TB, C), 1)
        cat_idsf = cat_ids.astype(jnp.float32)
        cat_logits = jnp.zeros((TB, C), jnp.float32)
        top_v = topv_sc[...]
        top_i = topi_sc[...]
        totf = float(total_cmds)
        for j in range(K):
            vj = top_v[:, j:j + 1]
            gj = top_i[:, j:j + 1].astype(jnp.float32)               # exact for idx < 2^24
            q = jnp.floor(gj / totf)
            mod = gj - q * totf                                      # idx % total_commands
            catj = jnp.zeros_like(mod)
            for b in cat_starts[1:]:                                 # static boundaries
                catj = catj + jnp.where(mod >= float(b), 1.0, 0.0)
            cat_logits = cat_logits + jnp.where(cat_idsf == catj, vj, 0.0)

        # category cross entropy per row (C is tiny, single pass)
        cm = jnp.max(cat_logits, axis=-1, keepdims=True)
        cls = jnp.log(jnp.sum(jnp.exp(cat_logits - cm), axis=-1, keepdims=True)) + cm
        clbl = cat_labels_ref[...]                                   # (TB, 1) int32
        cat_ll = jnp.sum(jnp.where(cat_ids == clbl, cat_logits, 0.0),
                         axis=-1, keepdims=True)
        cat_ce = cls - cat_ll

        per_row = jnp.where(row_valid, w_cmd * cmd_ce + w_cat * cat_ce, 0.0)
        tile_sum = jnp.sum(per_row, axis=0, keepdims=True)           # (1, 1)
        out_ref[...] = jnp.broadcast_to(tile_sum, (8, 128)).astype(jnp.float32)


def _round_up(x, m):
    return ((x + m - 1) // m) * m


def hierarchical_command_loss(logits, labels, category_labels, category_sizes,
                              command_weight=0.6, category_weight=0.4,
                              block_b=256, block_v=4096, upcast_compare=False,
                              vmem_limit_bytes=32 * 1024 * 1024):
    """logits: (B, V) float (f32 or bf16); labels, category_labels: (B,) int -> scalar f32.

    category_sizes: per-category command counts in hierarchy order (static Python ints).
    upcast_compare: set True on v5e with bf16 logits (no bf16 VPU); default keeps the
    top-K compare path in the storage dtype (best on v6e/v7x).
    """
    B, V = logits.shape
    assert block_b % 8 == 0 and block_v % 128 == 0
    C = len(category_sizes)
    total_cmds = int(sum(int(s) for s in category_sizes))
    cat_starts = [0]
    for s in list(category_sizes)[:-1]:
        cat_starts.append(cat_starts[-1] + int(s))
    K = min(5, V)

    # Batch tile: multiple of 8 (or full B); aim for >= 2 batch tiles so the
    # "parallel" axis spans both TensorCores on v7x.
    if B > block_b:
        TB = block_b
    else:
        TB = min(_round_up(max(1, pl.cdiv(B, 2)), 8), _round_up(B, 8))
    TV = V if V <= block_v else block_v
    nbt = pl.cdiv(B, TB)
    nkv = pl.cdiv(V, TV)

    labels2d = labels.astype(jnp.int32).reshape(B, 1)
    cat_labels2d = category_labels.astype(jnp.int32).reshape(B, 1)

    kernel = functools.partial(
        _hcl_kernel, B=B, V=V, TB=TB, TV=TV, C=C, K=K,
        total_cmds=total_cmds, cat_starts=cat_starts,
        w_cmd=float(command_weight), w_cat=float(category_weight),
        upcast_compare=bool(upcast_compare))

    partials = pl.pallas_call(
        kernel,
        out_shape=jax.ShapeDtypeStruct((nbt * 8, 128), jnp.float32),
        grid=(nbt, nkv),
        in_specs=[
            pl.BlockSpec((TB, 1), lambda bi, kv: (bi, 0)),    # labels (batch-tile only)
            pl.BlockSpec((TB, 1), lambda bi, kv: (bi, 0)),    # category labels
            pl.BlockSpec((TB, TV), lambda bi, kv: (bi, kv)),  # logits (storage dtype)
        ],
        out_specs=pl.BlockSpec((8, 128), lambda bi, kv: (bi, 0)),
        scratch_shapes=[
            pltpu.VMEM((TB, 1), jnp.float32),       # running max
            pltpu.VMEM((TB, 1), jnp.float32),       # running sum-exp
            pltpu.VMEM((TB, 1), jnp.float32),       # running label logit
            pltpu.VMEM((TB, K), jnp.float32),       # running top-K values
            pltpu.VMEM((TB, K), jnp.int32),         # running top-K global indices
        ],
        compiler_params=pltpu.CompilerParams(
            dimension_semantics=("parallel", "arbitrary"),
            vmem_limit_bytes=int(vmem_limit_bytes)),
    )(labels2d, cat_labels2d, logits)

    tile_sums = partials.reshape(nbt, 8, 128)[:, 0, 0]
    return jnp.sum(tile_sums) / jnp.float32(B)


def build_category_map(command_hierarchy, vocab_size):
    """cat_map[v] = category index of (v % total_commands), matching the PyTorch loop."""
    sizes = [len(cmds) for cmds in command_hierarchy.values()]
    total = sum(sizes)
    cat_of_mod = np.zeros((total,), np.int32)
    run = 0
    for ci, n in enumerate(sizes):
        cat_of_mod[run:run + n] = ci
        run += n
    return jnp.asarray(cat_of_mod[np.arange(vocab_size) % total], dtype=jnp.int32)


def _reference(logits, labels, category_labels, cat_map, num_categories,
               command_weight=0.6, category_weight=0.4):
    logits = logits.astype(jnp.float32)
    B, V = logits.shape
    k = min(5, V)
    logp = jax.nn.log_softmax(logits, axis=-1)
    cmd_ce = -jnp.take_along_axis(logp, labels[:, None].astype(jnp.int32), axis=-1)[:, 0]
    vals, idxs = jax.lax.top_k(logits, k)
    cats = cat_map[idxs]                                                 # (B, k)
    onehot = jax.nn.one_hot(cats, num_categories, dtype=jnp.float32)     # (B, k, C)
    cat_logits = jnp.einsum('bk,bkc->bc', vals, onehot)                  # zeros + scatter-add
    cat_logp = jax.nn.log_softmax(cat_logits, axis=-1)
    cat_ce = -jnp.take_along_axis(
        cat_logp, category_labels[:, None].astype(jnp.int32), axis=-1)[:, 0]
    return command_weight * jnp.mean(cmd_ce) + category_weight * jnp.mean(cat_ce)


if __name__ == "__main__":
    command_hierarchy = {
        "navigation": ["turn_left", "turn_right", "go_straight", "u_turn"],
        "speed": ["accelerate", "decelerate", "maintain", "stop"],
        "lane": ["change_left", "change_right", "keep_lane", "merge"],
    }
    category_sizes = [len(cmds) for cmds in command_hierarchy.values()]
    num_categories = len(category_sizes)

    key = jax.random.PRNGKey(0)
    k1, k2, k3 = jax.random.split(key, 3)

    # small shapes; B / V intentionally NOT multiples of the tiles to exercise masking
    B, V = 14, 300
    logits = jax.random.normal(k1, (B, V), dtype=jnp.float32)
    labels = jax.random.randint(k2, (B,), 0, V, dtype=jnp.int32)
    category_labels = jax.random.randint(k3, (B,), 0, num_categories, dtype=jnp.int32)

    # small tiles so the (batch, vocab) grid, streaming logsumexp, tile-local top-K
    # and the cross-tile merge are all exercised
    loss = hierarchical_command_loss(
        logits, labels, category_labels, category_sizes,
        command_weight=0.6, category_weight=0.4, block_b=8, block_v=128)
    jax.block_until_ready(loss)

    cat_map = build_category_map(command_hierarchy, V)
    ref = _reference(logits, labels, category_labels, cat_map, num_categories,
                     command_weight=0.6, category_weight=0.4)
    assert jnp.isfinite(loss), loss
    assert jnp.allclose(loss, ref, atol=1e-4, rtol=1e-5), (loss, ref)

    print("KERNEL_OK")
</pallas_src>

<mosaic_0001>
module attributes {stable_mosaic.version = 11 : i64} {
  func.func @_hcl_kernel(%arg0: i32, %arg1: i32, %arg2: memref<8x1xi32, #tpu.memory_space<vmem>>, %arg3: memref<8x1xi32, #tpu.memory_space<vmem>>, %arg4: memref<8x128xf32, #tpu.memory_space<vmem>>, %arg5: memref<8x128xf32, #tpu.memory_space<vmem>>, %arg6: memref<8x1xf32, #tpu.memory_space<vmem>>, %arg7: memref<8x1xf32, #tpu.memory_space<vmem>>, %arg8: memref<8x1xf32, #tpu.memory_space<vmem>>, %arg9: memref<8x5xf32, #tpu.memory_space<vmem>>, %arg10: memref<8x5xi32, #tpu.memory_space<vmem>>) attributes {dimension_semantics = [#tpu.dimension_semantics<parallel>, #tpu.dimension_semantics<arbitrary>], iteration_bounds = array<i64: 2, 3>, scalar_prefetch = 0 : i64, scratch_operands = 5 : i64, tpu.core_type = #tpu.core_type<tc>, window_params = [{transform_indices = @transform_0, window_bounds = array<i64: 8, 1>}, {transform_indices = @transform_1, window_bounds = array<i64: 8, 1>}, {transform_indices = @transform_2, window_bounds = array<i64: 8, 128>}, {transform_indices = @transform_3, window_bounds = array<i64: 8, 128>}]} {
    %c0 = arith.constant 0 : index
    %c0_0 = arith.constant 0 : index
    %0 = vector.load %arg4[%c0, %c0_0] : memref<8x128xf32, #tpu.memory_space<vmem>>, vector<8x128xf32>
    %1 = tpu.iota {dimensions = array<i32: 1>} : vector<8x128xi32>
    %c128_i32 = arith.constant 128 : i32
    %2 = arith.muli %arg1, %c128_i32 : i32
    %c300_i32 = arith.constant 300 : i32
    %3 = arith.subi %c300_i32, %2 : i32
    %4 = vector.broadcast %3 : i32 to vector<8x128xi32>
    %5 = arith.cmpi slt, %1, %4 : vector<8x128xi32>
    %cst = arith.constant -1.000000e+30 : f32
    %6 = vector.broadcast %cst : f32 to vector<8x128xf32>
    %7 = arith.select %5, %0, %6 : vector<8x128xi1>, vector<8x128xf32>
    %c0_i32 = arith.constant 0 : i32
    %8 = arith.cmpi eq, %arg1, %c0_i32 : i32
    %9 = arith.extui %8 : i1 to i32
    %cst_1 = arith.constant -1.000000e+30 : f32
    %c1073741824_i32 = arith.constant 1073741824 : i32
    %c0_i32_2 = arith.constant 0 : i32
    %10 = arith.cmpi ne, %9, %c0_i32_2 : i32
    scf.if %10 {
      %214 = vector.broadcast %cst_1 : f32 to vector<8x1xf32>
      %c0_69 = arith.constant 0 : index
      %c0_70 = arith.constant 0 : index
      %215 = vector.load %arg6[%c0_69, %c0_70] : memref<8x1xf32, #tpu.memory_space<vmem>>, vector<8x1xf32>
      tpu.vector_store %arg6[%c0_69, %c0_70], %214 {strides = array<i32>} : memref<8x1xf32, #tpu.memory_space<vmem>>, vector<8x1xf32>,
      %cst_71 = arith.constant 0.000000e+00 : f32
      %216 = vector.broadcast %cst_71 : f32 to vector<8x1xf32>
      %c0_72 = arith.constant 0 : index
      %c0_73 = arith.constant 0 : index
      %217 = vector.load %arg7[%c0_72, %c0_73] : memref<8x1xf32, #tpu.memory_space<vmem>>, vector<8x1xf32>
      tpu.vector_store %arg7[%c0_72, %c0_73], %216 {strides = array<i32>} : memref<8x1xf32, #tpu.memory_space<vmem>>, vector<8x1xf32>,
      %cst_74 = arith.constant 0.000000e+00 : f32
      %218 = vector.broadcast %cst_74 : f32 to vector<8x1xf32>
      %c0_75 = arith.constant 0 : index
      %c0_76 = arith.constant 0 : index
      %219 = vector.load %arg8[%c0_75, %c0_76] : memref<8x1xf32, #tpu.memory_space<vmem>>, vector<8x1xf32>
      tpu.vector_store %arg8[%c0_75, %c0_76], %218 {strides = array<i32>} : memref<8x1xf32, #tpu.memory_space<vmem>>, vector<8x1xf32>,
      %220 = vector.broadcast %cst_1 : f32 to vector<8x5xf32>
      %c0_77 = arith.constant 0 : index
      %c0_78 = arith.constant 0 : index
      %221 = vector.load %arg9[%c0_77, %c0_78] : memref<8x5xf32, #tpu.memory_space<vmem>>, vector<8x5xf32>
      tpu.vector_store %arg9[%c0_77, %c0_78], %220 {strides = array<i32>} : memref<8x5xf32, #tpu.memory_space<vmem>>, vector<8x5xf32>,
      %222 = vector.broadcast %c1073741824_i32 : i32 to vector<8x5xi32>
      %c0_79 = arith.constant 0 : index
      %c0_80 = arith.constant 0 : index
      %223 = vector.load %arg10[%c0_79, %c0_80] : memref<8x5xi32, #tpu.memory_space<vmem>>, vector<8x5xi32>
      tpu.vector_store %arg10[%c0_79, %c0_80], %222 {strides = array<i32>} : memref<8x5xi32, #tpu.memory_space<vmem>>, vector<8x5xi32>,
    } else {
    }
    %cst_3 = arith.constant dense<0xFF800000> : vector<8xf32>
    %11 = vector.multi_reduction <maximumf>, %7, %cst_3 [1] : vector<8x128xf32> to vector<8xf32>
    %12 = vector.shape_cast %11 : vector<8xf32> to vector<8x1xf32>
    %c0_4 = arith.constant 0 : index
    %c0_5 = arith.constant 0 : index
    %13 = vector.load %arg6[%c0_4, %c0_5] : memref<8x1xf32, #tpu.memory_space<vmem>>, vector<8x1xf32>
    %14 = arith.maximumf %13, %12 : vector<8x1xf32>
    %15 = arith.subf %13, %14 : vector<8x1xf32>
    %16 = math.exp %15 : vector<8x1xf32>
    %c0_6 = arith.constant 0 : index
    %c0_7 = arith.constant 0 : index
    %17 = vector.load %arg7[%c0_6, %c0_7] : memref<8x1xf32, #tpu.memory_space<vmem>>, vector<8x1xf32>
    %18 = arith.mulf %16, %17 : vector<8x1xf32>
    %19 = vector.broadcast %14 : vector<8x1xf32> to vector<8x128xf32>
    %20 = arith.subf %7, %19 : vector<8x128xf32>
    %21 = math.exp %20 : vector<8x128xf32>
    %cst_8 = arith.constant dense<0.000000e+00> : vector<8xf32>
    %22 = vector.multi_reduction <add>, %21, %cst_8 [1] : vector<8x128xf32> to vector<8xf32>
    %23 = vector.shape_cast %22 : vector<8xf32> to vector<8x1xf32>
    %24 = arith.addf %18, %23 : vector<8x1xf32>
    %c0_9 = arith.constant 0 : index
    %c0_10 = arith.constant 0 : index
    %25 = vector.load %arg7[%c0_9, %c0_10] : memref<8x1xf32, #tpu.memory_space<vmem>>, vector<8x1xf32>
    tpu.vector_store %arg7[%c0_9, %c0_10], %24 {strides = array<i32>} : memref<8x1xf32, #tpu.memory_space<vmem>>, vector<8x1xf32>,
    %c0_11 = arith.constant 0 : index
    %c0_12 = arith.constant 0 : index
    %26 = vector.load %arg6[%c0_11, %c0_12] : memref<8x1xf32, #tpu.memory_space<vmem>>, vector<8x1xf32>
    tpu.vector_store %arg6[%c0_11, %c0_12], %14 {strides = array<i32>} : memref<8x1xf32, #tpu.memory_space<vmem>>, vector<8x1xf32>,
    %c0_13 = arith.constant 0 : index
    %c0_14 = arith.constant 0 : index
    %27 = vector.load %arg2[%c0_13, %c0_14] : memref<8x1xi32, #tpu.memory_space<vmem>>, vector<8x1xi32>
    %c128_i32_15 = arith.constant 128 : i32
    %28 = arith.muli %arg1, %c128_i32_15 : i32
    %29 = vector.broadcast %28 : i32 to vector<8x1xi32>
    %30 = arith.subi %27, %29 : vector<8x1xi32>
    %31 = vector.broadcast %30 : vector<8x1xi32> to vector<8x128xi32>
    %32 = arith.cmpi eq, %1, %31 : vector<8x128xi32>
    %c0_16 = arith.constant 0 : index
    %c0_17 = arith.constant 0 : index
    %33 = vector.load %arg8[%c0_16, %c0_17] : memref<8x1xf32, #tpu.memory_space<vmem>>, vector<8x1xf32>
    %cst_18 = arith.constant 0.000000e+00 : f32
    %34 = vector.broadcast %cst_18 : f32 to vector<8x128xf32>
    %35 = arith.select %32, %7, %34 : vector<8x128xi1>, vector<8x128xf32>
    %cst_19 = arith.constant dense<0.000000e+00> : vector<8xf32>
    %36 = vector.multi_reduction <add>, %35, %cst_19 [1] : vector<8x128xf32> to vector<8xf32>
    %37 = vector.shape_cast %36 : vector<8xf32> to vector<8x1xf32>
    %38 = arith.addf %33, %37 : vector<8x1xf32>
    %c0_20 = arith.constant 0 : index
    %c0_21 = arith.constant 0 : index
    %39 = vector.load %arg8[%c0_20, %c0_21] : memref<8x1xf32, #tpu.memory_space<vmem>>, vector<8x1xf32>
    tpu.vector_store %arg8[%c0_20, %c0_21], %38 {strides = array<i32>} : memref<8x1xf32, #tpu.memory_space<vmem>>, vector<8x1xf32>,
    %40 = vector.broadcast %12 : vector<8x1xf32> to vector<8x128xf32>
    %41 = arith.cmpf oeq, %7, %40 : vector<8x128xf32>
    %c1073741824_i32_22 = arith.constant 1073741824 : i32
    %42 = vector.broadcast %c1073741824_i32_22 : i32 to vector<8x128xi32>
    %43 = arith.select %41, %1, %42 : vector<8x128xi1>, vector<8x128xi32>
    %cst_23 = arith.constant dense<2147483647> : vector<8xi32>
    %44 = vector.multi_reduction <minsi>, %43, %cst_23 [1] : vector<8x128xi32> to vector<8xi32>
    %45 = vector.shape_cast %44 : vector<8xi32> to vector<8x1xi32>
    %46 = vector.broadcast %12 : vector<8x1xf32> to vector<8x128xf32>
    %47 = arith.cmpf olt, %7, %46 : vector<8x128xf32>
    %48 = vector.broadcast %12 : vector<8x1xf32> to vector<8x128xf32>
    %49 = arith.cmpf oeq, %7, %48 : vector<8x128xf32>
    %50 = vector.broadcast %45 : vector<8x1xi32> to vector<8x128xi32>
    %51 = arith.cmpi sgt, %1, %50 : vector<8x128xi32>
    %52 = arith.andi %49, %51 : vector<8x128xi1>
    %53 = arith.ori %47, %52 : vector<8x128xi1>
    %cst_24 = arith.constant -1.000000e+30 : f32
    %54 = vector.broadcast %cst_24 : f32 to vector<8x128xf32>
    %55 = arith.select %53, %7, %54 : vector<8x128xi1>, vector<8x128xf32>
    %cst_25 = arith.constant dense<0xFF800000> : vector<8xf32>
    %56 = vector.multi_reduction <maximumf>, %55, %cst_25 [1] : vector<8x128xf32> to vector<8xf32>
    %57 = vector.shape_cast %56 : vector<8xf32> to vector<8x1xf32>
    %58 = vector.broadcast %57 : vector<8x1xf32> to vector<8x128xf32>
    %59 = arith.cmpf oeq, %55, %58 : vector<8x128xf32>
    %c1073741824_i32_26 = arith.constant 1073741824 : i32
    %60 = vector.broadcast %c1073741824_i32_26 : i32 to vector<8x128xi32>
    %61 = arith.select %59, %1, %60 : vector<8x128xi1>, vector<8x128xi32>
    %cst_27 = arith.constant dense<2147483647> : vector<8xi32>
    %62 = vector.multi_reduction <minsi>, %61, %cst_27 [1] : vector<8x128xi32> to vector<8xi32>
    %63 = vector.shape_cast %62 : vector<8xi32> to vector<8x1xi32>
    %64 = vector.broadcast %57 : vector<8x1xf32> to vector<8x128xf32>
    %65 = arith.cmpf olt, %7, %64 : vector<8x128xf32>
    %66 = vector.broadcast %57 : vector<8x1xf32> to vector<8x128xf32>
    %67 = arith.cmpf oeq, %7, %66 : vector<8x128xf32>
    %68 = vector.broadcast %63 : vector<8x1xi32> to vector<8x128xi32>
    %69 = arith.cmpi sgt, %1, %68 : vector<8x128xi32>
    %70 = arith.andi %67, %69 : vector<8x128xi1>
    %71 = arith.ori %65, %70 : vector<8x128xi1>
    %cst_28 = arith.constant -1.000000e+30 : f32
    %72 = vector.broadcast %cst_28 : f32 to vector<8x128xf32>
    %73 = arith.select %71, %7, %72 : vector<8x128xi1>, vector<8x128xf32>
    %cst_29 = arith.constant dense<0xFF800000> : vector<8xf32>
    %74 = vector.multi_reduction <maximumf>, %73, %cst_29 [1] : vector<8x128xf32> to vector<8xf32>
    %75 = vector.shape_cast %74 : vector<8xf32> to vector<8x1xf32>
    %76 = vector.broadcast %75 : vector<8x1xf32> to vector<8x128xf32>
    %77 = arith.cmpf oeq, %73, %76 : vector<8x128xf32>
    %c1073741824_i32_30 = arith.constant 1073741824 : i32
    %78 = vector.broadcast %c1073741824_i32_30 : i32 to vector<8x128xi32>
    %79 = arith.select %77, %1, %78 : vector<8x128xi1>, vector<8x128xi32>
    %cst_31 = arith.constant dense<2147483647> : vector<8xi32>
    %80 = vector.multi_reduction <minsi>, %79, %cst_31 [1] : vector<8x128xi32> to vector<8xi32>
    %81 = vector.shape_cast %80 : vector<8xi32> to vector<8x1xi32>
    %82 = vector.broadcast %75 : vector<8x1xf32> to vector<8x128xf32>
    %83 = arith.cmpf olt, %7, %82 : vector<8x128xf32>
    %84 = vector.broadcast %75 : vector<8x1xf32> to vector<8x128xf32>
    %85 = arith.cmpf oeq, %7, %84 : vector<8x128xf32>
    %86 = vector.broadcast %81 : vector<8x1xi32> to vector<8x128xi32>
    %87 = arith.cmpi sgt, %1, %86 : vector<8x128xi32>
    %88 = arith.andi %85, %87 : vector<8x128xi1>
    %89 = arith.ori %83, %88 : vector<8x128xi1>
    %cst_32 = arith.constant -1.000000e+30 : f32
    %90 = vector.broadcast %cst_32 : f32 to vector<8x128xf32>
    %91 = arith.select %89, %7, %90 : vector<8x128xi1>, vector<8x128xf32>
    %cst_33 = arith.constant dense<0xFF800000> : vector<8xf32>
    %92 = vector.multi_reduction <maximumf>, %91, %cst_33 [1] : vector<8x128xf32> to vector<8xf32>
    %93 = vector.shape_cast %92 : vector<8xf32> to vector<8x1xf32>
    %94 = vector.broadcast %93 : vector<8x1xf32> to vector<8x128xf32>
    %95 = arith.cmpf oeq, %91, %94 : vector<8x128xf32>
    %c1073741824_i32_34 = arith.constant 1073741824 : i32
    %96 = vector.broadcast %c1073741824_i32_34 : i32 to vector<8x128xi32>
    %97 = arith.select %95, %1, %96 : vector<8x128xi1>, vector<8x128xi32>
    %cst_35 = arith.constant dense<2147483647> : vector<8xi32>
    %98 = vector.multi_reduction <minsi>, %97, %cst_35 [1] : vector<8x128xi32> to vector<8xi32>
    %99 = vector.shape_cast %98 : vector<8xi32> to vector<8x1xi32>
    %100 = vector.broadcast %93 : vector<8x1xf32> to vector<8x128xf32>
    %101 = arith.cmpf olt, %7, %100 : vector<8x128xf32>
    %102 = vector.broadcast %93 : vector<8x1xf32> to vector<8x128xf32>
    %103 = arith.cmpf oeq, %7, %102 : vector<8x128xf32>
    %104 = vector.broadcast %99 : vector<8x1xi32> to vector<8x128xi32>
    %105 = arith.cmpi sgt, %1, %104 : vector<8x128xi32>
    %106 = arith.andi %103, %105 : vector<8x128xi1>
    %107 = arith.ori %101, %106 : vector<8x128xi1>
    %cst_36 = arith.constant -1.000000e+30 : f32
    %108 = vector.broadcast %cst_36 : f32 to vector<8x128xf32>
    %109 = arith.select %107, %7, %108 : vector<8x128xi1>, vector<8x128xf32>
    %cst_37 = arith.constant dense<0xFF800000> : vector<8xf32>
    %110 = vector.multi_reduction <maximumf>, %109, %cst_37 [1] : vector<8x128xf32> to vector<8xf32>
    %111 = vector.shape_cast %110 : vector<8xf32> to vector<8x1xf32>
    %112 = vector.broadcast %111 : vector<8x1xf32> to vector<8x128xf32>
    %113 = arith.cmpf oeq, %109, %112 : vector<8x128xf32>
    %c1073741824_i32_38 = arith.constant 1073741824 : i32
    %114 = vector.broadcast %c1073741824_i32_38 : i32 to vector<8x128xi32>
    %115 = arith.select %113, %1, %114 : vector<8x128xi1>, vector<8x128xi32>
    %cst_39 = arith.constant dense<2147483647> : vector<8xi32>
    %116 = vector.multi_reduction <minsi>, %115, %cst_39 [1] : vector<8x128xi32> to vector<8xi32>
    %117 = vector.shape_cast %116 : vector<8xi32> to vector<8x1xi32>
    %118 = tpu.concatenate %12, %57, %75, %93, %111 in 1 : vector<8x1xf32>, vector<8x1xf32>, vector<8x1xf32>, vector<8x1xf32>, vector<8x1xf32> -> vector<8x5xf32>
    %119 = tpu.concatenate %45, %63, %81, %99, %117 in 1 : vector<8x1xi32>, vector<8x1xi32>, vector<8x1xi32>, vector<8x1xi32>, vector<8x1xi32> -> vector<8x5xi32>
    %c128_i32_40 = arith.constant 128 : i32
    %120 = arith.muli %arg1, %c128_i32_40 : i32
    %121 = vector.broadcast %120 : i32 to vector<8x5xi32>
    %122 = arith.addi %119, %121 : vector<8x5xi32>
    %c0_41 = arith.constant 0 : index
    %c0_42 = arith.constant 0 : index
    %123 = vector.load %arg9[%c0_41, %c0_42] : memref<8x5xf32, #tpu.memory_space<vmem>>, vector<8x5xf32>
    %124 = tpu.concatenate %123, %118 in 1 : vector<8x5xf32>, vector<8x5xf32> -> vector<8x10xf32>
    %c0_43 = arith.constant 0 : index
    %c0_44 = arith.constant 0 : index
    %125 = vector.load %arg10[%c0_43, %c0_44] : memref<8x5xi32, #tpu.memory_space<vmem>>, vector<8x5xi32>
    %126 = tpu.concatenate %125, %122 in 1 : vector<8x5xi32>, vector<8x5xi32> -> vector<8x10xi32>
    %cst_45 = arith.constant dense<0xFF800000> : vector<8xf32>
    %127 = vector.multi_reduction <maximumf>, %124, %cst_45 [1] : vector<8x10xf32> to vector<8xf32>
    %128 = vector.shape_cast %127 : vector<8xf32> to vector<8x1xf32>
    %129 = vector.broadcast %128 : vector<8x1xf32> to vector<8x10xf32>
    %130 = arith.cmpf oeq, %124, %129 : vector<8x10xf32>
    %c1073741824_i32_46 = arith.constant 1073741824 : i32
    %131 = vector.broadcast %c1073741824_i32_46 : i32 to vector<8x10xi32>
    %132 = arith.select %130, %126, %131 : vector<8x10xi1>, vector<8x10xi32>
    %cst_47 = arith.constant dense<2147483647> : vector<8xi32>
    %133 = vector.multi_reduction <minsi>, %132, %cst_47 [1] : vector<8x10xi32> to vector<8xi32>
    %134 = vector.shape_cast %133 : vector<8xi32> to vector<8x1xi32>
    %135 = vector.broadcast %128 : vector<8x1xf32> to vector<8x10xf32>
    %136 = arith.cmpf olt, %124, %135 : vector<8x10xf32>
    %137 = vector.broadcast %128 : vector<8x1xf32> to vector<8x10xf32>
    %138 = arith.cmpf oeq, %124, %137 : vector<8x10xf32>
    %139 = vector.broadcast %134 : vector<8x1xi32> to vector<8x10xi32>
    %140 = arith.cmpi sgt, %126, %139 : vector<8x10xi32>
    %141 = arith.andi %138, %140 : vector<8x10xi1>
    %142 = arith.ori %136, %141 : vector<8x10xi1>
    %cst_48 = arith.constant -1.000000e+30 : f32
    %143 = vector.broadcast %cst_48 : f32 to vector<8x10xf32>
    %144 = arith.select %142, %124, %143 : vector<8x10xi1>, vector<8x10xf32>
    %cst_49 = arith.constant dense<0xFF800000> : vector<8xf32>
    %145 = vector.multi_reduction <maximumf>, %144, %cst_49 [1] : vector<8x10xf32> to vector<8xf32>
    %146 = vector.shape_cast %145 : vector<8xf32> to vector<8x1xf32>
    %147 = vector.broadcast %146 : vector<8x1xf32> to vector<8x10xf32>
    %148 = arith.cmpf oeq, %144, %147 : vector<8x10xf32>
    %c1073741824_i32_50 = arith.constant 1073741824 : i32
    %149 = vector.broadcast %c1073741824_i32_50 : i32 to vector<8x10xi32>
    %150 = arith.select %148, %126, %149 : vector<8x10xi1>, vector<8x10xi32>
    %cst_51 = arith.constant dense<2147483647> : vector<8xi32>
    %151 = vector.multi_reduction <minsi>, %150, %cst_51 [1] : vector<8x10xi32> to vector<8xi32>
    %152 = vector.shape_cast %151 : vector<8xi32> to vector<8x1xi32>
    %153 = vector.broadcast %146 : vector<8x1xf32> to vector<8x10xf32>
    %154 = arith.cmpf olt, %124, %153 : vector<8x10xf32>
    %155 = vector.broadcast %146 : vector<8x1xf32> to vector<8x10xf32>
    %156 = arith.cmpf oeq, %124, %155 : vector<8x10xf32>
    %157 = vector.broadcast %152 : vector<8x1xi32> to vector<8x10xi32>
    %158 = arith.cmpi sgt, %126, %157 : vector<8x10xi32>
    %159 = arith.andi %156, %158 : vector<8x10xi1>
    %160 = arith.ori %154, %159 : vector<8x10xi1>
    %cst_52 = arith.constant -1.000000e+30 : f32
    %161 = vector.broadcast %cst_52 : f32 to vector<8x10xf32>
    %162 = arith.select %160, %124, %161 : vector<8x10xi1>, vector<8x10xf32>
    %cst_53 = arith.constant dense<0xFF800000> : vector<8xf32>
    %163 = vector.multi_reduction <maximumf>, %162, %cst_53 [1] : vector<8x10xf32> to vector<8xf32>
    %164 = vector.shape_cast %163 : vector<8xf32> to vector<8x1xf32>
    %165 = vector.broadcast %164 : vector<8x1xf32> to vector<8x10xf32>
    %166 = arith.cmpf oeq, %162, %165 : vector<8x10xf32>
    %c1073741824_i32_54 = arith.constant 1073741824 : i32
    %167 = vector.broadcast %c1073741824_i32_54 : i32 to vector<8x10xi32>
    %168 = arith.select %166, %126, %167 : vector<8x10xi1>, vector<8x10xi32>
    %cst_55 = arith.constant dense<2147483647> : vector<8xi32>
    %169 = vector.multi_reduction <minsi>, %168, %cst_55 [1] : vector<8x10xi32> to vector<8xi32>
    %170 = vector.shape_cast %169 : vector<8xi32> to vector<8x1xi32>
    %171 = vector.broadcast %164 : vector<8x1xf32> to vector<8x10xf32>
    %172 = arith.cmpf olt, %124, %171 : vector<8x10xf32>
    %173 = vector.broadcast %164 : vector<8x1xf32> to vector<8x10xf32>
    %174 = arith.cmpf oeq, %124, %173 : vector<8x10xf32>
    %175 = vector.broadcast %170 : vector<8x1xi32> to vector<8x10xi32>
    %176 = arith.cmpi sgt, %126, %175 : vector<8x10xi32>
    %177 = arith.andi %174, %176 : vector<8x10xi1>
    %178 = arith.ori %172, %177 : vector<8x10xi1>
    %cst_56 = arith.constant -1.000000e+30 : f32
    %179 = vector.broadcast %cst_56 : f32 to vector<8x10xf32>
    %180 = arith.select %178, %124, %179 : vector<8x10xi1>, vector<8x10xf32>
    %cst_57 = arith.constant dense<0xFF800000> : vector<8xf32>
    %181 = vector.multi_reduction <maximumf>, %180, %cst_57 [1] : vector<8x10xf32> to vector<8xf32>
    %182 = vector.shape_cast %181 : vector<8xf32> to vector<8x1xf32>
    %183 = vector.broadcast %182 : vector<8x1xf32> to vector<8x10xf32>
    %184 = arith.cmpf oeq, %180, %183 : vector<8x10xf32>
    %c1073741824_i32_58 = arith.constant 1073741824 : i32
    %185 = vector.broadcast %c1073741824_i32_58 : i32 to vector<8x10xi32>
    %186 = arith.select %184, %126, %185 : vector<8x10xi1>, vector<8x10xi32>
    %cst_59 = arith.constant dense<2147483647> : vector<8xi32>
    %187 = vector.multi_reduction <minsi>, %186, %cst_59 [1] : vector<8x10xi32> to vector<8xi32>
    %188 = vector.shape_cast %187 : vector<8xi32> to vector<8x1xi32>
    %189 = vector.broadcast %182 : vector<8x1xf32> to vector<8x10xf32>
    %190 = arith.cmpf olt, %124, %189 : vector<8x10xf32>
    %191 = vector.broadcast %182 : vector<8x1xf32> to vector<8x10xf32>
    %192 = arith.cmpf oeq, %124, %191 : vector<8x10xf32>
    %193 = vector.broadcast %188 : vector<8x1xi32> to vector<8x10xi32>
    %194 = arith.cmpi sgt, %126, %193 : vector<8x10xi32>
    %195 = arith.andi %192, %194 : vector<8x10xi1>
    %196 = arith.ori %190, %195 : vector<8x10xi1>
    %cst_60 = arith.constant -1.000000e+30 : f32
    %197 = vector.broadcast %cst_60 : f32 to vector<8x10xf32>
    %198 = arith.select %196, %124, %197 : vector<8x10xi1>, vector<8x10xf32>
    %cst_61 = arith.constant dense<0xFF800000> : vector<8xf32>
    %199 = vector.multi_reduction <maximumf>, %198, %cst_61 [1] : vector<8x10xf32> to vector<8xf32>
    %200 = vector.shape_cast %199 : vector<8xf32> to vector<8x1xf32>
    %201 = vector.broadcast %200 : vector<8x1xf32> to vector<8x10xf32>
    %202 = arith.cmpf oeq, %198, %201 : vector<8x10xf32>
    %c1073741824_i32_62 = arith.constant 1073741824 : i32
    %203 = vector.broadcast %c1073741824_i32_62 : i32 to vector<8x10xi32>
    %204 = arith.select %202, %126, %203 : vector<8x10xi1>, vector<8x10xi32>
    %cst_63 = arith.constant dense<2147483647> : vector<8xi32>
    %205 = vector.multi_reduction <minsi>, %204, %cst_63 [1] : vector<8x10xi32> to vector<8xi32>
    %206 = vector.shape_cast %205 : vector<8xi32> to vector<8x1xi32>
    %207 = tpu.concatenate %128, %146, %164, %182, %200 in 1 : vector<8x1xf32>, vector<8x1xf32>, vector<8x1xf32>, vector<8x1xf32>, vector<8x1xf32> -> vector<8x5xf32>
    %c0_64 = arith.constant 0 : index
    %c0_65 = arith.constant 0 : index
    %208 = vector.load %arg9[%c0_64, %c0_65] : memref<8x5xf32, #tpu.memory_space<vmem>>, vector<8x5xf32>
    tpu.vector_store %arg9[%c0_64, %c0_65], %207 {strides = array<i32>} : memref<8x5xf32, #tpu.memory_space<vmem>>, vector<8x5xf32>,
    %209 = tpu.concatenate %134, %152, %170, %188, %206 in 1 : vector<8x1xi32>, vector<8x1xi32>, vector<8x1xi32>, vector<8x1xi32>, vector<8x1xi32> -> vector<8x5xi32>
    %c0_66 = arith.constant 0 : index
    %c0_67 = arith.constant 0 : index
    %210 = vector.load %arg10[%c0_66, %c0_67] : memref<8x5xi32, #tpu.memory_space<vmem>>, vector<8x5xi32>
    tpu.vector_store %arg10[%c0_66, %c0_67], %209 {strides = array<i32>} : memref<8x5xi32, #tpu.memory_space<vmem>>, vector<8x5xi32>,
    %c2_i32 = arith.constant 2 : i32
    %211 = arith.cmpi eq, %arg1, %c2_i32 : i32
    %212 = arith.extui %211 : i1 to i32
    %c0_i32_68 = arith.constant 0 : i32
    %213 = arith.cmpi ne, %212, %c0_i32_68 : i32
    scf.if %213 {
      %214 = tpu.iota {dimensions = array<i32: 0>} : vector<8x1xi32>
      %c8_i32 = arith.constant 8 : i32
      %215 = arith.muli %arg0, %c8_i32 : i32
      %216 = vector.broadcast %215 : i32 to vector<8x1xi32>
      %217 = arith.addi %214, %216 : vector<8x1xi32>
      %c14_i32 = arith.constant 14 : i32
      %218 = vector.broadcast %c14_i32 : i32 to vector<8x1xi32>
      %219 = arith.cmpi slt, %217, %218 : vector<8x1xi32>
      %c0_69 = arith.constant 0 : index
      %c0_70 = arith.constant 0 : index
      %220 = vector.load %arg7[%c0_69, %c0_70] : memref<8x1xf32, #tpu.memory_space<vmem>>, vector<8x1xf32>
      %221 = math.log %220 : vector<8x1xf32>
      %c0_71 = arith.constant 0 : index
      %c0_72 = arith.constant 0 : index
      %222 = vector.load %arg6[%c0_71, %c0_72] : memref<8x1xf32, #tpu.memory_space<vmem>>, vector<8x1xf32>
      %223 = arith.addf %221, %222 : vector<8x1xf32>
      %c0_73 = arith.constant 0 : index
      %c0_74 = arith.constant 0 : index
      %224 = vector.load %arg8[%c0_73, %c0_74] : memref<8x1xf32, #tpu.memory_space<vmem>>, vector<8x1xf32>
      %225 = arith.subf %223, %224 : vector<8x1xf32>
      %226 = tpu.iota {dimensions = array<i32: 1>} : vector<8x3xi32>
      %227 = arith.sitofp %226 : vector<8x3xi32> to vector<8x3xf32>
      %cst_75 = arith.constant 0.000000e+00 : f32
      %228 = vector.broadcast %cst_75 : f32 to vector<8x3xf32>
      %c0_76 = arith.constant 0 : index
      %c0_77 = arith.constant 0 : index
      %229 = vector.load %arg9[%c0_76, %c0_77] : memref<8x5xf32, #tpu.memory_space<vmem>>, vector<8x5xf32>
      %c0_78 = arith.constant 0 : index
      %c0_79 = arith.constant 0 : index
      %230 = vector.load %arg10[%c0_78, %c0_79] : memref<8x5xi32, #tpu.memory_space<vmem>>, vector<8x5xi32>
      %231 = vector.extract_strided_slice %229 {offsets = [0, 0], sizes = [8, 1], strides = [1, 1]} : vector<8x5xf32> to vector<8x1xf32>
      %232 = vector.extract_strided_slice %230 {offsets = [0, 0], sizes = [8, 1], strides = [1, 1]} : vector<8x5xi32> to vector<8x1xi32>
      %233 = arith.sitofp %232 : vector<8x1xi32> to vector<8x1xf32>
      %cst_80 = arith.constant 1.200000e+01 : f32
      %234 = vector.broadcast %cst_80 : f32 to vector<8x1xf32>
      %235 = arith.divf %233, %234 : vector<8x1xf32>
      %236 = math.floor %235 : vector<8x1xf32>
      %cst_81 = arith.constant 1.200000e+01 : f32
      %237 = vector.broadcast %cst_81 : f32 to vector<8x1xf32>
      %238 = arith.mulf %236, %237 : vector<8x1xf32>
      %239 = arith.subf %233, %238 : vector<8x1xf32>
      %cst_82 = arith.constant 0.000000e+00 : f32
      %240 = vector.broadcast %cst_82 : f32 to vector<8x1xf32>
      %cst_83 = arith.constant 4.000000e+00 : f32
      %241 = vector.broadcast %cst_83 : f32 to vector<8x1xf32>
      %242 = arith.cmpf oge, %239, %241 : vector<8x1xf32>
      %cst_84 = arith.constant 1.000000e+00 : f32
      %cst_85 = arith.constant 0.000000e+00 : f32
      %243 = vector.broadcast %cst_84 : f32 to vector<8x1xf32>
      %244 = vector.broadcast %cst_85 : f32 to vector<8x1xf32>
      %245 = arith.select %242, %243, %244 : vector<8x1xi1>, vector<8x1xf32>
      %246 = arith.addf %240, %245 : vector<8x1xf32>
      %cst_86 = arith.constant 8.000000e+00 : f32
      %247 = vector.broadcast %cst_86 : f32 to vector<8x1xf32>
      %248 = arith.cmpf oge, %239, %247 : vector<8x1xf32>
      %cst_87 = arith.constant 1.000000e+00 : f32
      %cst_88 = arith.constant 0.000000e+00 : f32
      %249 = vector.broadcast %cst_87 : f32 to vector<8x1xf32>
      %250 = vector.broadcast %cst_88 : f32 to vector<8x1xf32>
      %251 = arith.select %248, %249, %250 : vector<8x1xi1>, vector<8x1xf32>
      %252 = arith.addf %246, %251 : vector<8x1xf32>
      %253 = vector.broadcast %252 : vector<8x1xf32> to vector<8x3xf32>
      %254 = arith.cmpf oeq, %227, %253 : vector<8x3xf32>
      %cst_89 = arith.constant 0.000000e+00 : f32
      %255 = vector.shape_cast %231 : vector<8x1xf32> to vector<8x1xf32>
      %256 = vector.broadcast %255 : vector<8x1xf32> to vector<8x3xf32>
      %257 = vector.broadcast %cst_89 : f32 to vector<8x3xf32>
      %258 = arith.select %254, %256, %257 : vector<8x3xi1>, vector<8x3xf32>
      %259 = arith.addf %228, %258 : vector<8x3xf32>
      %260 = vector.extract_strided_slice %229 {offsets = [0, 1], sizes = [8, 1], strides = [1, 1]} : vector<8x5xf32> to vector<8x1xf32>
      %261 = vector.extract_strided_slice %230 {offsets = [0, 1], sizes = [8, 1], strides = [1, 1]} : vector<8x5xi32> to vector<8x1xi32>
      %262 = arith.sitofp %261 : vector<8x1xi32> to vector<8x1xf32>
      %cst_90 = arith.constant 1.200000e+01 : f32
      %263 = vector.broadcast %cst_90 : f32 to vector<8x1xf32>
      %264 = arith.divf %262, %263 : vector<8x1xf32>
      %265 = math.floor %264 : vector<8x1xf32>
      %cst_91 = arith.constant 1.200000e+01 : f32
      %266 = vector.broadcast %cst_91 : f32 to vector<8x1xf32>
      %267 = arith.mulf %265, %266 : vector<8x1xf32>
      %268 = arith.subf %262, %267 : vector<8x1xf32>
      %cst_92 = arith.constant 0.000000e+00 : f32
      %269 = vector.broadcast %cst_92 : f32 to vector<8x1xf32>
      %cst_93 = arith.constant 4.000000e+00 : f32
      %270 = vector.broadcast %cst_93 : f32 to vector<8x1xf32>
      %271 = arith.cmpf oge, %268, %270 : vector<8x1xf32>
      %cst_94 = arith.constant 1.000000e+00 : f32
      %cst_95 = arith.constant 0.000000e+00 : f32
      %272 = vector.broadcast %cst_94 : f32 to vector<8x1xf32>
      %273 = vector.broadcast %cst_95 : f32 to vector<8x1xf32>
      %274 = arith.select %271, %272, %273 : vector<8x1xi1>, vector<8x1xf32>
      %275 = arith.addf %269, %274 : vector<8x1xf32>
      %cst_96 = arith.constant 8.000000e+00 : f32
      %276 = vector.broadcast %cst_96 : f32 to vector<8x1xf32>
      %277 = arith.cmpf oge, %268, %276 : vector<8x1xf32>
      %cst_97 = arith.constant 1.000000e+00 : f32
      %cst_98 = arith.constant 0.000000e+00 : f32
      %278 = vector.broadcast %cst_97 : f32 to vector<8x1xf32>
      %279 = vector.broadcast %cst_98 : f32 to vector<8x1xf32>
      %280 = arith.select %277, %278, %279 : vector<8x1xi1>, vector<8x1xf32>
      %281 = arith.addf %275, %280 : vector<8x1xf32>
      %282 = vector.broadcast %281 : vector<8x1xf32> to vector<8x3xf32>
      %283 = arith.cmpf oeq, %227, %282 : vector<8x3xf32>
      %cst_99 = arith.constant 0.000000e+00 : f32
      %284 = vector.shape_cast %260 : vector<8x1xf32> to vector<8x1xf32>
      %285 = vector.broadcast %284 : vector<8x1xf32> to vector<8x3xf32>
      %286 = vector.broadcast %cst_99 : f32 to vector<8x3xf32>
      %287 = arith.select %283, %285, %286 : vector<8x3xi1>, vector<8x3xf32>
      %288 = arith.addf %259, %287 : vector<8x3xf32>
      %289 = vector.extract_strided_slice %229 {offsets = [0, 2], sizes = [8, 1], strides = [1, 1]} : vector<8x5xf32> to vector<8x1xf32>
      %290 = vector.extract_strided_slice %230 {offsets = [0, 2], sizes = [8, 1], strides = [1, 1]} : vector<8x5xi32> to vector<8x1xi32>
      %291 = arith.sitofp %290 : vector<8x1xi32> to vector<8x1xf32>
      %cst_100 = arith.constant 1.200000e+01 : f32
      %292 = vector.broadcast %cst_100 : f32 to vector<8x1xf32>
      %293 = arith.divf %291, %292 : vector<8x1xf32>
      %294 = math.floor %293 : vector<8x1xf32>
      %cst_101 = arith.constant 1.200000e+01 : f32
      %295 = vector.broadcast %cst_101 : f32 to vector<8x1xf32>
      %296 = arith.mulf %294, %295 : vector<8x1xf32>
      %297 = arith.subf %291, %296 : vector<8x1xf32>
      %cst_102 = arith.constant 0.000000e+00 : f32
      %298 = vector.broadcast %cst_102 : f32 to vector<8x1xf32>
      %cst_103 = arith.constant 4.000000e+00 : f32
      %299 = vector.broadcast %cst_103 : f32 to vector<8x1xf32>
      %300 = arith.cmpf oge, %297, %299 : vector<8x1xf32>
      %cst_104 = arith.constant 1.000000e+00 : f32
      %cst_105 = arith.constant 0.000000e+00 : f32
      %301 = vector.broadcast %cst_104 : f32 to vector<8x1xf32>
      %302 = vector.broadcast %cst_105 : f32 to vector<8x1xf32>
      %303 = arith.select %300, %301, %302 : vector<8x1xi1>, vector<8x1xf32>
      %304 = arith.addf %298, %303 : vector<8x1xf32>
      %cst_106 = arith.constant 8.000000e+00 : f32
      %305 = vector.broadcast %cst_106 : f32 to vector<8x1xf32>
      %306 = arith.cmpf oge, %297, %305 : vector<8x1xf32>
      %cst_107 = arith.constant 1.000000e+00 : f32
      %cst_108 = arith.constant 0.000000e+00 : f32
      %307 = vector.broadcast %cst_107 : f32 to vector<8x1xf32>
      %308 = vector.broadcast %cst_108 : f32 to vector<8x1xf32>
      %309 = arith.select %306, %307, %308 : vector<8x1xi1>, vector<8x1xf32>
      %310 = arith.addf %304, %309 : vector<8x1xf32>
      %311 = vector.broadcast %310 : vector<8x1xf32> to vector<8x3xf32>
      %312 = arith.cmpf oeq, %227, %311 : vector<8x3xf32>
      %cst_109 = arith.constant 0.000000e+00 : f32
      %313 = vector.shape_cast %289 : vector<8x1xf32> to vector<8x1xf32>
      %314 = vector.broadcast %313 : vector<8x1xf32> to vector<8x3xf32>
      %315 = vector.broadcast %cst_109 : f32 to vector<8x3xf32>
      %316 = arith.select %312, %314, %315 : vector<8x3xi1>, vector<8x3xf32>
      %317 = arith.addf %288, %316 : vector<8x3xf32>
      %318 = vector.extract_strided_slice %229 {offsets = [0, 3], sizes = [8, 1], strides = [1, 1]} : vector<8x5xf32> to vector<8x1xf32>
      %319 = vector.extract_strided_slice %230 {offsets = [0, 3], sizes = [8, 1], strides = [1, 1]} : vector<8x5xi32> to vector<8x1xi32>
      %320 = arith.sitofp %319 : vector<8x1xi32> to vector<8x1xf32>
      %cst_110 = arith.constant 1.200000e+01 : f32
      %321 = vector.broadcast %cst_110 : f32 to vector<8x1xf32>
      %322 = arith.divf %320, %321 : vector<8x1xf32>
      %323 = math.floor %322 : vector<8x1xf32>
      %cst_111 = arith.constant 1.200000e+01 : f32
      %324 = vector.broadcast %cst_111 : f32 to vector<8x1xf32>
      %325 = arith.mulf %323, %324 : vector<8x1xf32>
      %326 = arith.subf %320, %325 : vector<8x1xf32>
      %cst_112 = arith.constant 0.000000e+00 : f32
      %327 = vector.broadcast %cst_112 : f32 to vector<8x1xf32>
      %cst_113 = arith.constant 4.000000e+00 : f32
      %328 = vector.broadcast %cst_113 : f32 to vector<8x1xf32>
      %329 = arith.cmpf oge, %326, %328 : vector<8x1xf32>
      %cst_114 = arith.constant 1.000000e+00 : f32
      %cst_115 = arith.constant 0.000000e+00 : f32
      %330 = vector.broadcast %cst_114 : f32 to vector<8x1xf32>
      %331 = vector.broadcast %cst_115 : f32 to vector<8x1xf32>
      %332 = arith.select %329, %330, %331 : vector<8x1xi1>, vector<8x1xf32>
      %333 = arith.addf %327, %332 : vector<8x1xf32>
      %cst_116 = arith.constant 8.000000e+00 : f32
      %334 = vector.broadcast %cst_116 : f32 to vector<8x1xf32>
      %335 = arith.cmpf oge, %326, %334 : vector<8x1xf32>
      %cst_117 = arith.constant 1.000000e+00 : f32
      %cst_118 = arith.constant 0.000000e+00 : f32
      %336 = vector.broadcast %cst_117 : f32 to vector<8x1xf32>
      %337 = vector.broadcast %cst_118 : f32 to vector<8x1xf32>
      %338 = arith.select %335, %336, %337 : vector<8x1xi1>, vector<8x1xf32>
      %339 = arith.addf %333, %338 : vector<8x1xf32>
      %340 = vector.broadcast %339 : vector<8x1xf32> to vector<8x3xf32>
      %341 = arith.cmpf oeq, %227, %340 : vector<8x3xf32>
      %cst_119 = arith.constant 0.000000e+00 : f32
      %342 = vector.shape_cast %318 : vector<8x1xf32> to vector<8x1xf32>
      %343 = vector.broadcast %342 : vector<8x1xf32> to vector<8x3xf32>
      %344 = vector.broadcast %cst_119 : f32 to vector<8x3xf32>
      %345 = arith.select %341, %343, %344 : vector<8x3xi1>, vector<8x3xf32>
      %346 = arith.addf %317, %345 : vector<8x3xf32>
      %347 = vector.extract_strided_slice %229 {offsets = [0, 4], sizes = [8, 1], strides = [1, 1]} : vector<8x5xf32> to vector<8x1xf32>
      %348 = vector.extract_strided_slice %230 {offsets = [0, 4], sizes = [8, 1], strides = [1, 1]} : vector<8x5xi32> to vector<8x1xi32>
      %349 = arith.sitofp %348 : vector<8x1xi32> to vector<8x1xf32>
      %cst_120 = arith.constant 1.200000e+01 : f32
      %350 = vector.broadcast %cst_120 : f32 to vector<8x1xf32>
      %351 = arith.divf %349, %350 : vector<8x1xf32>
      %352 = math.floor %351 : vector<8x1xf32>
      %cst_121 = arith.constant 1.200000e+01 : f32
      %353 = vector.broadcast %cst_121 : f32 to vector<8x1xf32>
      %354 = arith.mulf %352, %353 : vector<8x1xf32>
      %355 = arith.subf %349, %354 : vector<8x1xf32>
      %cst_122 = arith.constant 0.000000e+00 : f32
      %356 = vector.broadcast %cst_122 : f32 to vector<8x1xf32>
      %cst_123 = arith.constant 4.000000e+00 : f32
      %357 = vector.broadcast %cst_123 : f32 to vector<8x1xf32>
      %358 = arith.cmpf oge, %355, %357 : vector<8x1xf32>
      %cst_124 = arith.constant 1.000000e+00 : f32
      %cst_125 = arith.constant 0.000000e+00 : f32
      %359 = vector.broadcast %cst_124 : f32 to vector<8x1xf32>
      %360 = vector.broadcast %cst_125 : f32 to vector<8x1xf32>
      %361 = arith.select %358, %359, %360 : vector<8x1xi1>, vector<8x1xf32>
      %362 = arith.addf %356, %361 : vector<8x1xf32>
      %cst_126 = arith.constant 8.000000e+00 : f32
      %363 = vector.broadcast %cst_126 : f32 to vector<8x1xf32>
      %364 = arith.cmpf oge, %355, %363 : vector<8x1xf32>
      %cst_127 = arith.constant 1.000000e+00 : f32
      %cst_128 = arith.constant 0.000000e+00 : f32
      %365 = vector.broadcast %cst_127 : f32 to vector<8x1xf32>
      %366 = vector.broadcast %cst_128 : f32 to vector<8x1xf32>
      %367 = arith.select %364, %365, %366 : vector<8x1xi1>, vector<8x1xf32>
      %368 = arith.addf %362, %367 : vector<8x1xf32>
      %369 = vector.broadcast %368 : vector<8x1xf32> to vector<8x3xf32>
      %370 = arith.cmpf oeq, %227, %369 : vector<8x3xf32>
      %cst_129 = arith.constant 0.000000e+00 : f32
      %371 = vector.shape_cast %347 : vector<8x1xf32> to vector<8x1xf32>
      %372 = vector.broadcast %371 : vector<8x1xf32> to vector<8x3xf32>
      %373 = vector.broadcast %cst_129 : f32 to vector<8x3xf32>
      %374 = arith.select %370, %372, %373 : vector<8x3xi1>, vector<8x3xf32>
      %375 = arith.addf %346, %374 : vector<8x3xf32>
      %cst_130 = arith.constant dense<0xFF800000> : vector<8xf32>
      %376 = vector.multi_reduction <maximumf>, %375, %cst_130 [1] : vector<8x3xf32> to vector<8xf32>
      %377 = vector.shape_cast %376 : vector<8xf32> to vector<8x1xf32>
      %378 = vector.broadcast %377 : vector<8x1xf32> to vector<8x3xf32>
      %379 = arith.subf %375, %378 : vector<8x3xf32>
      %380 = math.exp %379 : vector<8x3xf32>
      %cst_131 = arith.constant dense<0.000000e+00> : vector<8xf32>
      %381 = vector.multi_reduction <add>, %380, %cst_131 [1] : vector<8x3xf32> to vector<8xf32>
      %382 = vector.shape_cast %381 : vector<8xf32> to vector<8x1xf32>
      %383 = math.log %382 : vector<8x1xf32>
      %384 = arith.addf %383, %377 : vector<8x1xf32>
      %c0_132 = arith.constant 0 : index
      %c0_133 = arith.constant 0 : index
      %385 = vector.load %arg3[%c0_132, %c0_133] : memref<8x1xi32, #tpu.memory_space<vmem>>, vector<8x1xi32>
      %386 = vector.broadcast %385 : vector<8x1xi32> to vector<8x3xi32>
      %387 = arith.cmpi eq, %226, %386 : vector<8x3xi32>
      %cst_134 = arith.constant 0.000000e+00 : f32
      %388 = vector.broadcast %cst_134 : f32 to vector<8x3xf32>
      %389 = arith.select %387, %375, %388 : vector<8x3xi1>, vector<8x3xf32>
      %cst_135 = arith.constant dense<0.000000e+00> : vector<8xf32>
      %390 = vector.multi_reduction <add>, %389, %cst_135 [1] : vector<8x3xf32> to vector<8xf32>
      %391 = vector.shape_cast %390 : vector<8xf32> to vector<8x1xf32>
      %392 = arith.subf %384, %391 : vector<8x1xf32>
      %cst_136 = arith.constant 6.000000e-01 : f32
      %393 = vector.broadcast %cst_136 : f32 to vector<8x1xf32>
      %394 = arith.mulf %393, %225 : vector<8x1xf32>
      %cst_137 = arith.constant 4.000000e-01 : f32
      %395 = vector.broadcast %cst_137 : f32 to vector<8x1xf32>
      %396 = arith.mulf %395, %392 : vector<8x1xf32>
      %397 = arith.addf %394, %396 : vector<8x1xf32>
      %cst_138 = arith.constant 0.000000e+00 : f32
      %398 = vector.broadcast %cst_138 : f32 to vector<8x1xf32>
      %399 = arith.select %219, %397, %398 : vector<8x1xi1>, vector<8x1xf32>
      %cst_139 = arith.constant dense<0.000000e+00> : vector<1xf32>
      %400 = vector.multi_reduction <add>, %399, %cst_139 [0] : vector<8x1xf32> to vector<1xf32>
      %401 = vector.shape_cast %400 : vector<1xf32> to vector<1x1xf32>
      %402 = vector.shape_cast %401 : vector<1x1xf32> to vector<1x1xf32>
      %403 = vector.broadcast %402 : vector<1x1xf32> to vector<8x128xf32>
      %c0_140 = arith.constant 0 : index
      %c0_141 = arith.constant 0 : index
      %404 = vector.load %arg5[%c0_140, %c0_141] : memref<8x128xf32, #tpu.memory_space<vmem>>, vector<8x128xf32>
      tpu.vector_store %arg5[%c0_140, %c0_141], %403 {strides = array<i32>} : memref<8x128xf32, #tpu.memory_space<vmem>>, vector<8x128xf32>,
    } else {
    }
    return
  }
  func.func @transform_0(%arg0: i32, %arg1: i32) -> (i32, i32) {
    %c0_i32 = arith.constant 0 : i32
    %c0_i32_0 = arith.constant 0 : i32
    return %arg0, %c0_i32 : i32, i32
  }
  func.func @transform_1(%arg0: i32, %arg1: i32) -> (i32, i32) {
    %c0_i32 = arith.constant 0 : i32
    %c0_i32_0 = arith.constant 0 : i32
    return %arg0, %c0_i32 : i32, i32
  }
  func.func @transform_2(%arg0: i32, %arg1: i32) -> (i32, i32) {
    %c0_i32 = arith.constant 0 : i32
    return %arg0, %arg1 : i32, i32
  }
  func.func @transform_3(%arg0: i32, %arg1: i32) -> (i32, i32) {
    %c0_i32 = arith.constant 0 : i32
    %c0_i32_0 = arith.constant 0 : i32
    return %arg0, %c0_i32 : i32, i32
  }
}

</mosaic_0001>

<llo_original>
// kernel: tpu_custom_call.1
$region0: #{tpu_custom_call.1}
  #allocation0 [shape = 'u32[]', space=smem, size = 0x4, offset = 0x4, fixed_abs, tag = 'smem constant byte address 0x4 - core index']
  #allocation1 [shape = 'u32[72,128]{1,0:T(1,128)}', space=vmem, size = 0x9000, scoped, tag = 'internal scratch']
  #allocation2 [shape = 'f32[8,1]{1,0:T(8,128)}', space=vmem, size = 0x1000, scoped, tag = 'scratch operand']
  #allocation3 [shape = 'f32[8,1]{1,0:T(8,128)}', space=vmem, size = 0x1000, scoped, tag = 'scratch operand']
  #allocation4 [shape = 'f32[8,1]{1,0:T(8,128)}', space=vmem, size = 0x1000, scoped, tag = 'scratch operand']
  #allocation5 [shape = 'f32[8,5]{1,0:T(8,128)}', space=vmem, size = 0x1000, scoped, tag = 'scratch operand']
  #allocation6 [shape = 's32[8,5]{1,0:T(8,128)}', space=vmem, size = 0x1000, scoped, tag = 'scratch operand']
  %s0 = inlined_call_operand.vmem [shape: s32[14,1], index: 0, kind: input, shape index: {}]
  %s1 = inlined_call_operand.vmem [shape: s32[14,1], index: 1, kind: input, shape index: {}]
  %s2 = inlined_call_operand.hbm [shape: f32[14,300], index: 2, kind: input, shape index: {}]
  %s3 = inlined_call_operand.hbm [shape: f32[16,128], index: 3, kind: output, shape index: {}]
  %s4 = sld [smem:[#allocation0]]
  $region57: #{tpu_custom_call.1} parent=0
    _
  %s6 = ssub.s32 1, %s4
  %s7 = scalar_select 0, %s6, %s4
  $region1: #{tpu_custom_call.1} parent=0
    #allocation7 [shape = 'u8[8192]{0}', space=vmem, size = 0x2000, scoped, tag = 'input window, operand 2']
    #allocation8 [shape = 's32[2]{0}', space=sflag, size = 0x8, scoped, tag = 'scoped memory for tpu_custom_call.1']
    #allocation9 [shape = 's32[2]{0}', space=sflag, size = 0x8, scoped, tag = 'scoped memory for tpu_custom_call.1']
    #allocation10 [shape = 'u8[8192]{0}', space=vmem, size = 0x2000, scoped, tag = 'output window, operand 0']
    %8 = vsyncpa [#allocation8], 0
    %s9 = scalar_lea.sflag [#allocation8], 1
    %10 = vsyncpa %s9, 0
    %11 = vsyncpa [#allocation9], 0
    %s12 = scalar_lea.sflag [#allocation9], 1
    %13 = vsyncpa %s12, 0
    loop: start=0, step=1, limit=8
    $region2: #{tpu_custom_call.1} parent=1 // loop_pre_header
      _
    $region3: #{tpu_custom_call.1} parent=1 // loop_header
      %s15 = sphi 0, %s19
      %p16 = scmp.ge.s32.totalorder %s15, 8
      %s22 = sphi 0, %s34
      %s23 = sphi 0, %s30
      %s24 = sphi 0, %s22
      %s25 = sphi 0, %s23
      %s26 = sphi 0, %s24
      %s27 = sphi 0, %s25
      %s37 = sphi 0, %s39
      %s40 = sphi 0, %s37
      %s41 = sphi 0, %s40
      %s57 = sphi 0, %s41
      %s63 = sphi 0, %s65
      %s66 = sphi 0, %s63
      %s67 = sphi 0, %s66
      %s83 = sphi 0, %s67
      %s91 = sphi 0, %s93
      %s94 = sphi 0, %s91
      %s95 = sphi 0, %s94
      %s111 = sphi 0, %s95
      %s117 = sphi 0, %s119
      %s120 = sphi 0, %s117
      %s121 = sphi 0, %s120
      %s137 = sphi 0, %s121
    $region4: #{tpu_custom_call.1} parent=1 // loop_header_branch
      %18 = sbr.rel (%p16) target = $region8
    $region5: #{tpu_custom_call.1} parent=1 // loop_body
      %s20 = ssub.s32 %s15, 1
      %s21 = ssub.s32 %s15, 2
      %s28 = sadd.s32 1, %s23
      %p29 = scmp.ge.s32.totalorder %s28, 3
      %s30 = scalar_select %p29, 0, %s28
      %s31 = sadd.s32 1, %s22
      %s32 = scalar_select %p29, %s31, %s22
      %p33 = scmp.ge.s32.totalorder %s32, 2
      %s34 = scalar_select %p33, 0, %s32
      %s35 = ssub.s32 %s22, %s34
      %p36 = scmp.eq.s32.totalorder %s35, 0
      %s38 = sadd.s32 %s37, 1
      %s39 = scalar_select %p36, %s37, %s38
      %p42 = pneg %p36
      %p43 = scmp.eq.s32.totalorder %s15, 5
      %p44 = por %p42, %p43
      %p45 = scmp.ne.s32.totalorder %s37, %s40
      %p46 = scmp.eq.s32.totalorder %s15, 0
      %p47 = por %p45, %p46
      %p48 = scmp.ne.s32.totalorder %s37, %s40
      %p49 = scmp.eq.s32.totalorder %s20, 5
      %p50 = por %p48, %p49
      %p51 = scmp.ne.s32.totalorder %s40, %s41
      %p52 = scmp.eq.s32.totalorder %s20, 0
      %p53 = por %p51, %p52
      %p54 = scmp.ne.s32.totalorder %s40, %s41
      %p55 = scmp.eq.s32.totalorder %s21, 5
      %p56 = por %p54, %p55
      %p58 = scmp.ne.s32.totalorder %s41, %s57
      %p59 = scmp.eq.s32.totalorder %s21, 0
      %p60 = por %p58, %p59
      %s61 = ssub.s32 %s22, %s34
      %p62 = scmp.eq.s32.totalorder %s61, 0
      %s64 = sadd.s32 %s63, 1
      %s65 = scalar_select %p62, %s63, %s64
      %p68 = pneg %p62
      %p69 = scmp.eq.s32.totalorder %s15, 5
      %p70 = por %p68, %p69
      %p71 = scmp.ne.s32.totalorder %s63, %s66
      %p72 = scmp.eq.s32.totalorder %s15, 0
      %p73 = por %p71, %p72
      %p74 = scmp.ne.s32.totalorder %s63, %s66
      %p75 = scmp.eq.s32.totalorder %s20, 5
      %p76 = por %p74, %p75
      %p77 = scmp.ne.s32.totalorder %s66, %s67
      %p78 = scmp.eq.s32.totalorder %s20, 0
      %p79 = por %p77, %p78
      %p80 = scmp.ne.s32.totalorder %s66, %s67
      %p81 = scmp.eq.s32.totalorder %s21, 5
      %p82 = por %p80, %p81
      %p84 = scmp.ne.s32.totalorder %s67, %s83
      %p85 = scmp.eq.s32.totalorder %s21, 0
      %p86 = por %p84, %p85
      %s87 = ssub.s32 %s22, %s34
      %s88 = ssub.s32 %s23, %s30
      %s89 = sor.u32 %s87, %s88
      %p90 = scmp.eq.s32.totalorder %s89, 0
      %s92 = sadd.s32 %s91, 1
      %s93 = scalar_select %p90, %s91, %s92
      %p96 = pneg %p90
      %p97 = scmp.eq.s32.totalorder %s15, 5
      %p98 = por %p96, %p97
      %p99 = scmp.ne.s32.totalorder %s91, %s94
      %p100 = scmp.eq.s32.totalorder %s15, 0
      %p101 = por %p99, %p100
      %p102 = scmp.ne.s32.totalorder %s91, %s94
      %p103 = scmp.eq.s32.totalorder %s20, 5
      %p104 = por %p102, %p103
      %p105 = scmp.ne.s32.totalorder %s94, %s95
      %p106 = scmp.eq.s32.totalorder %s20, 0
      %p107 = por %p105, %p106
      %p108 = scmp.ne.s32.totalorder %s94, %s95
      %p109 = scmp.eq.s32.totalorder %s21, 5
      %p110 = por %p108, %p109
      %p112 = scmp.ne.s32.totalorder %s95, %s111
      %p113 = scmp.eq.s32.totalorder %s21, 0
      %p114 = por %p112, %p113
      %s115 = ssub.s32 %s22, %s34
      %p116 = scmp.eq.s32.totalorder %s115, 0
      %s118 = sadd.s32 %s117, 1
      %s119 = scalar_select %p116, %s117, %s118
      %p122 = pneg %p116
      %p123 = scmp.eq.s32.totalorder %s15, 5
      %p124 = por %p122, %p123
      %p125 = scmp.ne.s32.totalorder %s117, %s120
      %p126 = scmp.eq.s32.totalorder %s15, 0
      %p127 = por %p125, %p126
      %p128 = scmp.ne.s32.totalorder %s117, %s120
      %p129 = scmp.eq.s32.totalorder %s20, 5
      %p130 = por %p128, %p129
      %p131 = scmp.ne.s32.totalorder %s120, %s121
      %p132 = scmp.eq.s32.totalorder %s20, 0
      %p133 = por %p131, %p132
      %p134 = scmp.ne.s32.totalorder %s120, %s121
      %p135 = scmp.eq.s32.totalorder %s21, 5
      %p136 = por %p134, %p135
      %p138 = scmp.ne.s32.totalorder %s121, %s137
      %p139 = scmp.eq.s32.totalorder %s21, 0
      %p140 = por %p138, %p139
      %p141 = scmp.le.s32.totalorder 1, %s15
      %p142 = scmp.lt.s32.totalorder %s15, 7
      %p143 = pnand %p141, %p142
      %p144 = pneg %p143
      // Predicated region
      $region9: #{tpu_custom_call.1} parent=5 // pred_check
        _
      $region10: #{tpu_custom_call.1} parent=5 // pred_check_branch
        %146 = sbr.rel (%p143) target = $region12
      $region11: #{tpu_custom_call.1} parent=5 // pred_region
        %s147 = ssub.s32 %s15, 1
      $region12: #{tpu_custom_call.1} parent=5 // pred_fallthru
        _
      %p148 = scmp.lt.s32.totalorder %s15, 6
      // Predicated region
      $region13: #{tpu_custom_call.1} parent=5 // pred_check
        %p149 = pneg %p148
      $region14: #{tpu_custom_call.1} parent=5 // pred_check_branch
        %151 = sbr.rel (%p149) target = $region16
      $region15: #{tpu_custom_call.1} parent=5 // pred_region
        // Predicated region
        $region17: #{tpu_custom_call.1} parent=15 // pred_check
          %p152 = pneg %p47
        $region18: #{tpu_custom_call.1} parent=15 // pred_check_branch
          %154 = sbr.rel (%p152) target = $region20
        $region19: #{tpu_custom_call.1} parent=15 // pred_region
          %p155 = scmp.lt.s32.totalorder %s22, 1
          %s156 = scalar_select %p155, %s22, 1
          %s157 = smul.addr %s156, 8
          %s158 = scalar_lea.vmem %s0, %s157
        $region20: #{tpu_custom_call.1} parent=15 // pred_fallthru
          _
        // Predicated region
        $region21: #{tpu_custom_call.1} parent=15 // pred_check
          %p159 = pneg %p73
        $region22: #{tpu_custom_call.1} parent=15 // pred_check_branch
          %161 = sbr.rel (%p159) target = $region24
        $region23: #{tpu_custom_call.1} parent=15 // pred_region
          %p162 = scmp.lt.s32.totalorder %s22, 1
          %s163 = scalar_select %p162, %s22, 1
          %s164 = smul.addr %s163, 8
          %s165 = scalar_lea.vmem %s1, %s164
        $region24: #{tpu_custom_call.1} parent=15 // pred_fallthru
          _
        // Predicated region
        $region25: #{tpu_custom_call.1} parent=15 // pred_check
          %p166 = pneg %p101
        $region26: #{tpu_custom_call.1} parent=15 // pred_check_branch
          %168 = sbr.rel (%p166) target = $region28
        $region27: #{tpu_custom_call.1} parent=15 // pred_region
          %s169 = sand.u32 %s91, 1
          %s170 = scalar_lea.sflag [#allocation8], %s169
          %s171 = sand.u32 %s91, 1
          %s172 = smul.addr %s171, 8
          %s173 = scalar_lea.vmem [#allocation7], %s172
          %175 = vsyncadd %s170, 0
          %s176 = smul.addr %s22, 3
          %s177 = sadd.s32 %s23, %s176
          %s178 = smul.addr %s177, 8
          %s179 = scalar_lea.hbm %s2, %s178
          %s181 = sshll.u32 %s179, 4
          %s182 = int_to_ptr.hbm [resolvable:$true] %s181
          %s183 = sshll.u32 %s173, 4
          %s184 = int_to_ptr.vmem [resolvable:$true] %s183
          %186 = dma.hbm_to_vmem [thread:$0]  %s182, 128, %s184, %s170
        $region28: #{tpu_custom_call.1} parent=15 // pred_fallthru
          _
      $region16: #{tpu_custom_call.1} parent=5 // pred_fallthru
        _
      %p187 = scmp.le.s32.totalorder 1, %s15
      %p188 = scmp.lt.s32.totalorder %s15, 7
      %p189 = pnand %p187, %p188
      %p190 = pneg %p189
      // Predicated region
      $region29: #{tpu_custom_call.1} parent=5 // pred_check
        _
      $region30: #{tpu_custom_call.1} parent=5 // pred_check_branch
        %192 = sbr.rel (%p189) target = $region32
      $region31: #{tpu_custom_call.1} parent=5 // pred_region
        %s193 = ssub.s32 %s15, 1
        %s194 = sand.u32 %s94, 1
        %s195 = scalar_lea.sflag [#allocation8], %s194
        %s196 = sand.u32 %s94, 1
        %s197 = smul.addr %s196, 8
        %s198 = scalar_lea.vmem [#allocation7], %s197
        // Predicated region
        $region33: #{tpu_custom_call.1} parent=31 // pred_check
          %p199 = pneg %p107
        $region34: #{tpu_custom_call.1} parent=31 // pred_check_branch
          %201 = sbr.rel (%p199) target = $region36
        $region35: #{tpu_custom_call.1} parent=31 // pred_region
          %203 = dma.done %s195, 128
        $region36: #{tpu_custom_call.1} parent=31 // pred_fallthru
          _
        %p204 = scmp.lt.s32.totalorder %s24, 1
        %s205 = scalar_select %p204, %s24, 1
        %s206 = smul.addr %s205, 8
        %s207 = scalar_lea.vmem %s0, %s206
        %p208 = pneg %p53
        %p209 = pneg %p50
        %p210 = scmp.lt.s32.totalorder %s24, 1
        %s211 = scalar_select %p210, %s24, 1
        %s212 = smul.addr %s211, 8
        %s213 = scalar_lea.vmem %s1, %s212
        %p214 = pneg %p79
        %p215 = pneg %p76
        %s216 = sand.u32 %s94, 1
        %s217 = scalar_lea.sflag [#allocation8], %s216
        %s218 = sand.u32 %s94, 1
        %s219 = smul.addr %s218, 8
        %s220 = scalar_lea.vmem [#allocation7], %s219
        %p221 = pneg %p107
        %p222 = pneg %p104
        %p223 = pneg %p133
        %p224 = pneg %p130
        %s225 = sand.u32 %s120, 1
        %s226 = scalar_lea.sflag [#allocation9], %s225
        %s227 = sand.u32 %s120, 1
        %s228 = smul.addr %s227, 8
        %s229 = scalar_lea.vmem [#allocation10], %s228
        %p230 = scmp.lt.s32.totalorder %s24, 1
        %s231 = scalar_select %p230, %s24, 1
        %s232 = smul.addr %s231, 8
        %s233 = scalar_lea.vmem %s0, %s232
        %p234 = scmp.lt.s32.totalorder %s24, 1
        %s235 = scalar_select %p234, %s24, 1
        %s236 = smul.addr %s235, 8
        %s237 = scalar_lea.vmem %s1, %s236
        %v238 = vld [vmem:[%s198] sm:$0xff]
        %v239 = vlaneseq
        %v240 = vand.u32 %v239, 127
        %s241 = smul.u32 %s25, 128
        %s242 = ssub.s32 300, %s241
        %v243 = vstv %s242
        %vm244 = vcmp.lt.s32.totalorder %v240, %v243
        %v245 = vsel %vm244, %v238, -1e+30
        %p246 = scmp.eq.s32.totalorder %s25, 0
        // Predicated region
        $region37: #{tpu_custom_call.1} parent=31 // pred_check
          %p247 = pneg %p246
        $region38: #{tpu_custom_call.1} parent=31 // pred_check_branch
          %249 = sbr.rel (%p247) target = $region40
        $region39: #{tpu_custom_call.1} parent=31 // pred_region
          %vm250 = vcmask 7168
          %251 = vst.msk [vmem:[#allocation2] sm:$0xff] %vm250, -1e+30
          %252 = vst.msk [vmem:[#allocation3] sm:$0xff] %vm250, 0.0
          %253 = vst.msk [vmem:[#allocation4] sm:$0xff] %vm250, 0.0
          %vm254 = vcmask 39936
          %255 = vst.msk [vmem:[#allocation5] sm:$0xff] %vm254, -1e+30
          %256 = vst.msk [vmem:[#allocation6] sm:$0xff] %vm254, 1073741824
        $region40: #{tpu_custom_call.1} parent=31 // pred_fallthru
          _
        %257 = vmax.xlane.f32.xlu0 %v245
        %v258 = vpop.xlane.xlu0 %257
        %v259 = vld [vmem:[#allocation2] sm:$0xff]
        %v260 = vmax.f32 %v259, %v258
        %v261 = vsub.f32 %v259, %v260
        %v262 = vmul.f32 %v261, 1.442695
        %v263 = vpow.pop %v262
        %v264 = vld [vmem:[#allocation3] sm:$0xff]
        %v265 = vmul.f32 %v263, %v264
        %267 = vset.pattern.permute.xlu0 0
        %268 = vperm.xlu0 %267, %v260
        %v269 = vpop.permute.xlu0 %268
        %v271 = vsub.f32 %v245, %v269
        %v272 = vmul.f32 %v271, 1.442695
        %v273 = vpow.pop %v272
        %274 = vadd.xlane.f32.xlu0 %v273
        %v275 = vpop.xlane.xlu0 %274
        %v276 = vadd.f32 %v265, %v275
        %vm277 = vcmask 7168
        %278 = vst.msk [vmem:[#allocation3] sm:$0xff] %vm277, %v276
        %279 = vst.msk [vmem:[#allocation2] sm:$0xff] %vm277, %v260
        %v280 = vld [vmem:[%s233] sm:$0xff]
        %v281 = vstv %s241
        %v282 = vsub.s32 %v280, %v281
        %283 = vset.pattern.permute.xlu0 0
        %284 = vperm.xlu0 %283, %v282
        %v285 = vpop.permute.xlu0 %284
        %vm286 = vcmp.eq.s32.totalorder %v240, %v285
        %v287 = vld [vmem:[#allocation4] sm:$0xff]
        %v288 = vsel %vm286, %v245, 0.0
        %289 = vadd.xlane.f32.xlu0 %v288
        %v290 = vpop.xlane.xlu0 %289
        %v291 = vadd.f32 %v287, %v290
        %292 = vst.msk [vmem:[#allocation4] sm:$0xff] %vm277, %v291
        %vm293 = vcmp.eq.f32.partialorder %v245, %v258
        %v294 = vsel %vm293, %v240, 1073741824
        %v295 = vand.u32 %v294, 65535
        %v296 = vshra.s32 %v294, 16
        %v297 = vcvt.s32.f32 %v295
        %v298 = vcvt.s32.f32 %v296
        %299 = vmin.xlane.f32.xlu0 %v298
        %v300 = vpop.xlane.xlu0 %299
        %vm301 = vcmp.eq.f32.partialorder %v298, %v300
        %v302 = vsel %vm301, %v297, inf
        %303 = vmin.xlane.f32.xlu0 %v302
        %v304 = vpop.xlane.xlu0 %303
        %v305 = vcvt.f32.s32 %v304
        %v306 = vcvt.f32.s32 %v300
        %v307 = vshll.u32 %v306, 16
        %v308 = vadd.s32 %v307, %v305
        %vm309 = vcmp.lt.f32.partialorder %v245, %v258
        %vm310 = vcmp.gt.s32.totalorder %v240, %v308
        %vm311 = vmand %vm293, %vm310
        %vm312 = vmor %vm309, %vm311
        %v313 = vsel %vm312, %v245, -1e+30
        %314 = vmax.xlane.f32.xlu0 %v313
        %v315 = vpop.xlane.xlu0 %314
        %vm316 = vcmp.eq.f32.partialorder %v313, %v315
        %v317 = vsel %vm316, %v240, 1073741824
        %v318 = vand.u32 %v317, 65535
        %v319 = vshra.s32 %v317, 16
        %v320 = vcvt.s32.f32 %v318
        %v321 = vcvt.s32.f32 %v319
        %322 = vmin.xlane.f32.xlu0 %v321
        %v323 = vpop.xlane.xlu0 %322
        %vm324 = vcmp.eq.f32.partialorder %v321, %v323
        %v325 = vsel %vm324, %v320, inf
        %326 = vmin.xlane.f32.xlu0 %v325
        %v327 = vpop.xlane.xlu0 %326
        %v328 = vcvt.f32.s32 %v327
        %v329 = vcvt.f32.s32 %v323
        %v330 = vshll.u32 %v329, 16
        %v331 = vadd.s32 %v330, %v328
        %vm332 = vcmp.lt.f32.partialorder %v245, %v315
        %vm333 = vcmp.eq.f32.partialorder %v245, %v315
        %vm334 = vcmp.gt.s32.totalorder %v240, %v331
        %vm335 = vmand %vm333, %vm334
        %vm336 = vmor %vm332, %vm335
        %v337 = vsel %vm336, %v245, -1e+30
        %338 = vmax.xlane.f32.xlu0 %v337
        %v339 = vpop.xlane.xlu0 %338
        %vm340 = vcmp.eq.f32.partialorder %v337, %v339
        %v341 = vsel %vm340, %v240, 1073741824
        %v342 = vand.u32 %v341, 65535
        %v343 = vshra.s32 %v341, 16
        %v344 = vcvt.s32.f32 %v342
        %v345 = vcvt.s32.f32 %v343
        %346 = vmin.xlane.f32.xlu0 %v345
        %v347 = vpop.xlane.xlu0 %346
        %vm348 = vcmp.eq.f32.partialorder %v345, %v347
        %v349 = vsel %vm348, %v344, inf
        %350 = vmin.xlane.f32.xlu0 %v349
        %v351 = vpop.xlane.xlu0 %350
        %v352 = vcvt.f32.s32 %v351
        %v353 = vcvt.f32.s32 %v347
        %v354 = vshll.u32 %v353, 16
        %v355 = vadd.s32 %v354, %v352
        %vm356 = vcmp.lt.f32.partialorder %v245, %v339
        %vm357 = vcmp.eq.f32.partialorder %v245, %v339
        %vm358 = vcmp.gt.s32.totalorder %v240, %v355
        %vm359 = vmand %vm357, %vm358
        %vm360 = vmor %vm356, %vm359
        %v361 = vsel %vm360, %v245, -1e+30
        %362 = vmax.xlane.f32.xlu0 %v361
        %v363 = vpop.xlane.xlu0 %362
        %vm364 = vcmp.eq.f32.partialorder %v361, %v363
        %v365 = vsel %vm364, %v240, 1073741824
        %v366 = vand.u32 %v365, 65535
        %v367 = vshra.s32 %v365, 16
        %v368 = vcvt.s32.f32 %v366
        %v369 = vcvt.s32.f32 %v367
        %370 = vmin.xlane.f32.xlu0 %v369
        %v371 = vpop.xlane.xlu0 %370
        %vm372 = vcmp.eq.f32.partialorder %v369, %v371
        %v373 = vsel %vm372, %v368, inf
        %374 = vmin.xlane.f32.xlu0 %v373
        %v375 = vpop.xlane.xlu0 %374
        %v376 = vcvt.f32.s32 %v375
        %v377 = vcvt.f32.s32 %v371
        %v378 = vshll.u32 %v377, 16
        %v379 = vadd.s32 %v378, %v376
        %vm380 = vcmp.lt.f32.partialorder %v245, %v363
        %vm381 = vcmp.eq.f32.partialorder %v245, %v363
        %vm382 = vcmp.gt.s32.totalorder %v240, %v379
        %vm383 = vmand %vm381, %vm382
        %vm384 = vmor %vm380, %vm383
        %v385 = vsel %vm384, %v245, -1e+30
        %386 = vmax.xlane.f32.xlu0 %v385
        %v387 = vpop.xlane.xlu0 %386
        %vm388 = vcmp.eq.f32.partialorder %v385, %v387
        %v389 = vsel %vm388, %v240, 1073741824
        %v390 = vand.u32 %v389, 65535
        %v391 = vshra.s32 %v389, 16
        %v392 = vcvt.s32.f32 %v390
        %v393 = vcvt.s32.f32 %v391
        %394 = vmin.xlane.f32.xlu0 %v393
        %v395 = vpop.xlane.xlu0 %394
        %vm396 = vcmp.eq.f32.partialorder %v393, %v395
        %v397 = vsel %vm396, %v392, inf
        %398 = vmin.xlane.f32.xlu0 %v397
        %v399 = vpop.xlane.xlu0 %398
        %v400 = vcvt.f32.s32 %v399
        %v401 = vcvt.f32.s32 %v395
        %v402 = vshll.u32 %v401, 16
        %v403 = vadd.s32 %v402, %v400
        %v404 = vsel %vm277, %v258, %v315
        %vm405 = vcmask 15360
        %v406 = vsel %vm405, %v404, %v339
        %vm407 = vcmask 23552
        %v408 = vsel %vm407, %v406, %v363
        %vm409 = vcmask 31744
        %v410 = vsel %vm409, %v408, %v387
        %v411 = vsel %vm277, %v308, %v331
        %v412 = vsel %vm405, %v411, %v355
        %v413 = vsel %vm407, %v412, %v379
        %v414 = vsel %vm409, %v413, %v403
        %v415 = vadd.s32 %v414, %v281
        %v416 = vld [vmem:[#allocation5] sm:$0xff]
        %418 = vrot.lane.b32.xlu0 %v410, 5
        %v419 = vpop.permute.xlu0 %418
        %vm421 = vcmask 39936
        %v422 = vsel %vm421, %v416, %v419
        %v423 = vld [vmem:[#allocation6] sm:$0xff]
        %424 = vrot.lane.b32.xlu0 %v415, 5
        %v425 = vpop.permute.xlu0 %424
        %v426 = vsel %vm421, %v423, %v425
        %vm427 = vcmask 80896
        %v428 = vsel %vm427, %v422, -inf
        %429 = vmax.xlane.f32.xlu0 %v428
        %v430 = vpop.xlane.xlu0 %429
        %vm431 = vcmp.eq.f32.partialorder %v422, %v430
        %v432 = vsel %vm431, %v426, 1073741824
        %v433 = vsel %vm427, %v432, 2147483647
        %v434 = vand.u32 %v433, 65535
        %v435 = vshra.s32 %v433, 16
        %v436 = vcvt.s32.f32 %v434
        %v437 = vcvt.s32.f32 %v435
        %438 = vmin.xlane.f32.xlu0 %v437
        %v439 = vpop.xlane.xlu0 %438
        %vm440 = vcmp.eq.f32.partialorder %v437, %v439
        %v441 = vsel %vm440, %v436, inf
        %442 = vmin.xlane.f32.xlu0 %v441
        %v443 = vpop.xlane.xlu0 %442
        %v444 = vcvt.f32.s32 %v443
        %v445 = vcvt.f32.s32 %v439
        %v446 = vshll.u32 %v445, 16
        %v447 = vadd.s32 %v446, %v444
        %vm448 = vcmp.lt.f32.partialorder %v422, %v430
        %vm449 = vcmp.gt.s32.totalorder %v426, %v447
        %vm450 = vmand %vm431, %vm449
        %vm451 = vmor %vm448, %vm450
        %v452 = vsel %vm451, %v422, -1e+30
        %v453 = vsel %vm427, %v452, -inf
        %454 = vmax.xlane.f32.xlu0 %v453
        %v455 = vpop.xlane.xlu0 %454
        %vm456 = vcmp.eq.f32.partialorder %v452, %v455
        %v457 = vsel %vm456, %v426, 1073741824
        %v458 = vsel %vm427, %v457, 2147483647
        %v459 = vand.u32 %v458, 65535
        %v460 = vshra.s32 %v458, 16
        %v461 = vcvt.s32.f32 %v459
        %v462 = vcvt.s32.f32 %v460
        %463 = vmin.xlane.f32.xlu0 %v462
        %v464 = vpop.xlane.xlu0 %463
        %vm465 = vcmp.eq.f32.partialorder %v462, %v464
        %v466 = vsel %vm465, %v461, inf
        %467 = vmin.xlane.f32.xlu0 %v466
        %v468 = vpop.xlane.xlu0 %467
        %v469 = vcvt.f32.s32 %v468
        %v470 = vcvt.f32.s32 %v464
        %v471 = vshll.u32 %v470, 16
        %v472 = vadd.s32 %v471, %v469
        %vm473 = vcmp.lt.f32.partialorder %v422, %v455
        %vm474 = vcmp.eq.f32.partialorder %v422, %v455
        %vm475 = vcmp.gt.s32.totalorder %v426, %v472
        %vm476 = vmand %vm474, %vm475
        %vm477 = vmor %vm473, %vm476
        %v478 = vsel %vm477, %v422, -1e+30
        %v479 = vsel %vm427, %v478, -inf
        %480 = vmax.xlane.f32.xlu0 %v479
        %v481 = vpop.xlane.xlu0 %480
        %vm482 = vcmp.eq.f32.partialorder %v478, %v481
        %v483 = vsel %vm482, %v426, 1073741824
        %v484 = vsel %vm427, %v483, 2147483647
        %v485 = vand.u32 %v484, 65535
        %v486 = vshra.s32 %v484, 16
        %v487 = vcvt.s32.f32 %v485
        %v488 = vcvt.s32.f32 %v486
        %489 = vmin.xlane.f32.xlu0 %v488
        %v490 = vpop.xlane.xlu0 %489
        %vm491 = vcmp.eq.f32.partialorder %v488, %v490
        %v492 = vsel %vm491, %v487, inf
        %493 = vmin.xlane.f32.xlu0 %v492
        %v494 = vpop.xlane.xlu0 %493
        %v495 = vcvt.f32.s32 %v494
        %v496 = vcvt.f32.s32 %v490
        %v497 = vshll.u32 %v496, 16
        %v498 = vadd.s32 %v497, %v495
        %vm499 = vcmp.lt.f32.partialorder %v422, %v481
        %vm500 = vcmp.eq.f32.partialorder %v422, %v481
        %vm501 = vcmp.gt.s32.totalorder %v426, %v498
        %vm502 = vmand %vm500, %vm501
        %vm503 = vmor %vm499, %vm502
        %v504 = vsel %vm503, %v422, -1e+30
        %v505 = vsel %vm427, %v504, -inf
        %506 = vmax.xlane.f32.xlu0 %v505
        %v507 = vpop.xlane.xlu0 %506
        %vm508 = vcmp.eq.f32.partialorder %v504, %v507
        %v509 = vsel %vm508, %v426, 1073741824
        %v510 = vsel %vm427, %v509, 2147483647
        %v511 = vand.u32 %v510, 65535
        %v512 = vshra.s32 %v510, 16
        %v513 = vcvt.s32.f32 %v511
        %v514 = vcvt.s32.f32 %v512
        %515 = vmin.xlane.f32.xlu0 %v514
        %v516 = vpop.xlane.xlu0 %515
        %vm517 = vcmp.eq.f32.partialorder %v514, %v516
        %v518 = vsel %vm517, %v513, inf
        %519 = vmin.xlane.f32.xlu0 %v518
        %v520 = vpop.xlane.xlu0 %519
        %v521 = vcvt.f32.s32 %v520
        %v522 = vcvt.f32.s32 %v516
        %v523 = vshll.u32 %v522, 16
        %v524 = vadd.s32 %v523, %v521
        %vm525 = vcmp.lt.f32.partialorder %v422, %v507
        %vm526 = vcmp.eq.f32.partialorder %v422, %v507
        %vm527 = vcmp.gt.s32.totalorder %v426, %v524
        %vm528 = vmand %vm526, %vm527
        %vm529 = vmor %vm525, %vm528
        %v530 = vsel %vm529, %v422, -1e+30
        %v531 = vsel %vm427, %v530, -inf
        %532 = vmax.xlane.f32.xlu0 %v531
        %v533 = vpop.xlane.xlu0 %532
        %vm534 = vcmp.eq.f32.partialorder %v530, %v533
        %v535 = vsel %vm534, %v426, 1073741824
        %v536 = vsel %vm427, %v535, 2147483647
        %v537 = vand.u32 %v536, 65535
        %v538 = vshra.s32 %v536, 16
        %v539 = vcvt.s32.f32 %v537
        %v540 = vcvt.s32.f32 %v538
        %541 = vmin.xlane.f32.xlu0 %v540
        %v542 = vpop.xlane.xlu0 %541
        %vm543 = vcmp.eq.f32.partialorder %v540, %v542
        %v544 = vsel %vm543, %v539, inf
        %545 = vmin.xlane.f32.xlu0 %v544
        %v546 = vpop.xlane.xlu0 %545
        %v547 = vcvt.f32.s32 %v546
        %v548 = vcvt.f32.s32 %v542
        %v549 = vshll.u32 %v548, 16
        %v550 = vadd.s32 %v549, %v547
        %v551 = vsel %vm277, %v430, %v455
        %v552 = vsel %vm405, %v551, %v481
        %v553 = vsel %vm407, %v552, %v507
        %v554 = vsel %vm409, %v553, %v533
        %555 = vst.msk [vmem:[#allocation5] sm:$0xff] %vm421, %v554
        %v556 = vsel %vm277, %v447, %v472
        %v557 = vsel %vm405, %v556, %v498
        %v558 = vsel %vm407, %v557, %v524
        %v559 = vsel %vm409, %v558, %v550
        %560 = vst.msk [vmem:[#allocation6] sm:$0xff] %vm421, %v559
        %p561 = scmp.eq.s32.totalorder %s25, 2
        // Predicated region
        $region41: #{tpu_custom_call.1} parent=31 // pred_check
          %p562 = pneg %p561
        $region42: #{tpu_custom_call.1} parent=31 // pred_check_branch
          %564 = sbr.rel (%p562) target = $region44
        $region43: #{tpu_custom_call.1} parent=31 // pred_region
          %v565 = vlaneseq
          %v566 = vshrl.u32 %v565, 7
          %s567 = smul.u32 %s24, 8
          %v568 = vstv %s567
          %v569 = vadd.s32 %v566, %v568
          %vm570 = vcmp.lt.s32.totalorder %v569, 14
          %v571 = vld [vmem:[#allocation3] sm:$0xff]
          %v572 = vlog2.pop %v571
          %v573 = vmul.f32 %v572, 0.6931472
          %v574 = vld [vmem:[#allocation2] sm:$0xff]
          %v575 = vadd.f32 %v573, %v574
          %v576 = vld [vmem:[#allocation4] sm:$0xff]
          %v577 = vsub.f32 %v575, %v576
          %v578 = vcvt.s32.f32 %v240
          %v579 = vld [vmem:[#allocation5] sm:$0xff]
          %v580 = vld [vmem:[#allocation6] sm:$0xff]
          %v581 = vcvt.s32.f32 %v580
          %v582 = vrcp.pop 12.0
          %v583 = vmul.f32 12.0, %v582
          %v584 = vsub.f32 1.0, %v583
          %v585 = vmul.f32 %v582, %v584
          %v586 = vadd.f32 %v582, %v585
          %vm587 = vweird.f32 %v582
          %v588 = vsel %vm587, %v582, %v586
          %v589 = vmul.f32 %v581, %v588
          %v590 = vfloor.f32 %v589
          %v591 = vmul.f32 %v590, 12.0
          %v592 = vsub.f32 %v581, %v591
          %vm593 = vcmp.ge.f32.partialorder %v592, 4.0
          %v594 = vsel %vm593, 1.0, 0.0
          %v595 = vadd.f32 %v594, 0.0
          %vm596 = vcmp.ge.f32.partialorder %v592, 8.0
          %v597 = vsel %vm596, 1.0, 0.0
          %v598 = vadd.f32 %v595, %v597
          %600 = vset.pattern.permute.xlu0 0
          %601 = vperm.xlu0 %600, %v598
          %v602 = vpop.permute.xlu0 %601
          %vm604 = vcmp.eq.f32.partialorder %v578, %v602
          %606 = vset.pattern.permute.xlu0 0
          %607 = vperm.xlu0 %606, %v579
          %v608 = vpop.permute.xlu0 %607
          %v610 = vsel %vm604, %v608, 0.0
          %v611 = vadd.f32 %v610, 0.0
          %612 = vset.pattern.permute.xlu0 1
          %613 = vperm.xlu0 %612, %v598
          %v614 = vpop.permute.xlu0 %613
          %vm616 = vcmp.eq.f32.partialorder %v578, %v614
          %617 = vset.pattern.permute.xlu0 1
          %618 = vperm.xlu0 %617, %v579
          %v619 = vpop.permute.xlu0 %618
          %v621 = vsel %vm616, %v619, 0.0
          %v622 = vadd.f32 %v611, %v621
          %623 = vset.pattern.permute.xlu0 2
          %624 = vperm.xlu0 %623, %v598
          %v625 = vpop.permute.xlu0 %624
          %vm627 = vcmp.eq.f32.partialorder %v578, %v625
          %628 = vset.pattern.permute.xlu0 2
          %629 = vperm.xlu0 %628, %v579
          %v630 = vpop.permute.xlu0 %629
          %v632 = vsel %vm627, %v630, 0.0
          %v633 = vadd.f32 %v622, %v632
          %634 = vset.pattern.permute.xlu0 3
          %635 = vperm.xlu0 %634, %v598
          %v636 = vpop.permute.xlu0 %635
          %vm638 = vcmp.eq.f32.partialorder %v578, %v636
          %639 = vset.pattern.permute.xlu0 3
          %640 = vperm.xlu0 %639, %v579
          %v641 = vpop.permute.xlu0 %640
          %v643 = vsel %vm638, %v641, 0.0
          %v644 = vadd.f32 %v633, %v643
          %645 = vset.pattern.permute.xlu0 4
          %646 = vperm.xlu0 %645, %v598
          %v647 = vpop.permute.xlu0 %646
          %vm649 = vcmp.eq.f32.partialorder %v578, %v647
          %650 = vset.pattern.permute.xlu0 4
          %651 = vperm.xlu0 %650, %v579
          %v652 = vpop.permute.xlu0 %651
          %v654 = vsel %vm649, %v652, 0.0
          %v655 = vadd.f32 %v644, %v654
          %v656 = vsel %vm407, %v655, -inf
          %657 = vmax.xlane.f32.xlu0 %v656
          %v658 = vpop.xlane.xlu0 %657
          %v659 = vsub.f32 %v655, %v658
          %v660 = vmul.f32 %v659, 1.442695
          %v661 = vpow.pop %v660
          %v662 = vsel %vm407, %v661, 0.0
          %663 = vadd.xlane.f32.xlu0 %v662
          %v664 = vpop.xlane.xlu0 %663
          %v665 = vlog2.pop %v664
          %v666 = vmul.f32 %v665, 0.6931472
          %v667 = vadd.f32 %v666, %v658
          %v668 = vld [vmem:[%s237] sm:$0xff]
          %669 = vset.pattern.permute.xlu0 0
          %670 = vperm.xlu0 %669, %v668
          %v671 = vpop.permute.xlu0 %670
          %vm672 = vcmp.eq.s32.totalorder %v240, %v671
          %v673 = vsel %vm672, %v655, 0.0
          %v674 = vsel %vm407, %v673, 0.0
          %675 = vadd.xlane.f32.xlu0 %v674
          %v676 = vpop.xlane.xlu0 %675
          %v677 = vsub.f32 %v667, %v676
          %v678 = vmul.f32 %v577, 0.6
          %v679 = vmul.f32 %v677, 0.4
          %v680 = vadd.f32 %v678, %v679
          %v681 = vsel %vm570, %v680, 0.0
          %v682 = vsel %vm277, %v681, 0.0
          %v683 = vrot.slane %v682, 4
          %v684 = vadd.f32 %v682, %v683
          %v685 = vrot.slane %v684, 2
          %v686 = vadd.f32 %v684, %v685
          %v687 = vrot.slane %v686, 1
          %v688 = vadd.f32 %v686, %v687
          %690 = vset.pattern.permute.xlu0 0
          %691 = vperm.xlu0 %690, %v688
          %v692 = vpop.permute.xlu0 %691
          %694 = vst [vmem:[%s229] sm:$0xff] %v692
        $region44: #{tpu_custom_call.1} parent=31 // pred_fallthru
          _
        %s695 = sand.u32 %s120, 1
        %s696 = scalar_lea.sflag [#allocation9], %s695
        %s697 = sand.u32 %s120, 1
        %s698 = smul.addr %s697, 8
        %s699 = scalar_lea.vmem [#allocation10], %s698
        // Predicated region
        $region45: #{tpu_custom_call.1} parent=31 // pred_check
          %p700 = pneg %p130
        $region46: #{tpu_custom_call.1} parent=31 // pred_check_branch
          %702 = sbr.rel (%p700) target = $region48
        $region47: #{tpu_custom_call.1} parent=31 // pred_region
          %704 = vsyncadd %s696, 0
          %s705 = smul.addr %s24, 8
          %s706 = scalar_lea.hbm %s3, %s705
          %s708 = sshll.u32 %s699, 4
          %s709 = int_to_ptr.vmem [resolvable:$true] %s708
          %s710 = sshll.u32 %s706, 4
          %s711 = int_to_ptr.hbm [resolvable:$true] %s710
          %713 = dma.vmem_to_hbm [thread:$0]  %s709, 128, %s711, %s696
        $region48: #{tpu_custom_call.1} parent=31 // pred_fallthru
          _
      $region32: #{tpu_custom_call.1} parent=5 // pred_fallthru
        _
      %p714 = scmp.le.s32.totalorder 2, %s15
      // Predicated region
      $region49: #{tpu_custom_call.1} parent=5 // pred_check
        %p715 = pneg %p714
      $region50: #{tpu_custom_call.1} parent=5 // pred_check_branch
        %717 = sbr.rel (%p715) target = $region52
      $region51: #{tpu_custom_call.1} parent=5 // pred_region
        %s718 = ssub.s32 %s15, 2
        // Predicated region
        $region53: #{tpu_custom_call.1} parent=51 // pred_check
          %p719 = pneg %p136
        $region54: #{tpu_custom_call.1} parent=51 // pred_check_branch
          %721 = sbr.rel (%p719) target = $region56
        $region55: #{tpu_custom_call.1} parent=51 // pred_region
          %s722 = sand.u32 %s121, 1
          %s723 = scalar_lea.sflag [#allocation9], %s722
          %s724 = sand.u32 %s121, 1
          %s725 = smul.addr %s724, 8
          %s726 = scalar_lea.vmem [#allocation10], %s725
          %728 = dma.done %s723, 128
        $region56: #{tpu_custom_call.1} parent=51 // pred_fallthru
          _
      $region52: #{tpu_custom_call.1} parent=5 // pred_fallthru
        _
    $region6: #{tpu_custom_call.1} parent=1 // loop_footer
      %s19 = sadd.s32 1, %s15
    $region7: #{tpu_custom_call.1} parent=1 // loop_footer_branch
      %14 = sbr.rel target = $region3
    $region8: #{tpu_custom_call.1} parent=1 // loop_exit
      _
    %729 = vsyncpa [#allocation8], 1
    %s730 = scalar_lea.sflag [#allocation8], 1
    %731 = vsyncpa %s730, 1
    %732 = vsyncpa [#allocation9], 1
    %s733 = scalar_lea.sflag [#allocation9], 1
    %734 = vsyncpa %s733, 1

</llo_original>
